<compile_context>
chip_gen: v7x
topology: tpu7x:2x2x1
jax: 0.10.0
libtpu: 0.0.40
codegen_flags: <defaults>
</compile_context>

<pallas_src>
import functools
from collections import defaultdict

import numpy as np
import jax
import jax.numpy as jnp
from jax import lax
from jax.experimental import pallas as pl
from jax.experimental.pallas import tpu as pltpu


# ----------------------------------------------------------------------------
# Deterministic parameter construction (same as the PyTorch __init__).
# ----------------------------------------------------------------------------
def gabor_filter(size, wavelength, orientation):
    lambda_ = size * 2.0 / wavelength
    sigma = lambda_ * 0.8
    gamma = 0.3
    theta = np.deg2rad(orientation + 90)
    x, y = np.mgrid[:size, :size] - size // 2
    rotx = x * np.cos(theta) + y * np.sin(theta)
    roty = -x * np.sin(theta) + y * np.cos(theta)
    filt = np.exp(-(rotx ** 2 + gamma ** 2 * roty ** 2) / (2 * sigma ** 2))
    filt *= np.cos(2 * np.pi * rotx / lambda_)
    filt[np.sqrt(x ** 2 + y ** 2) > size / 2] = 0
    filt = filt - np.mean(filt)
    filt = filt / np.sqrt(np.sum(filt ** 2))
    return filt


def make_gabor_weights(size, wavelength, orientations=(90, -45, 0, 45)):
    w = np.stack([gabor_filter(size, wavelength, o) for o in orientations])
    return np.asarray(w, dtype=np.float32)  # (num_orientations, size, size)


def _group_taps(weights):
    """Group (ky, kx) taps whose per-channel weight vectors are bit-identical.

    For the HMAX Gabor bank the 12 circular-mask corner taps all equal
    (-mean_c / norm_c) after mean subtraction, so one shared running window
    sum + 4 constant multiplies replaces 12x4 mul+adds.  Groups of size 1 are
    left on the ordinary per-tap path.
    """
    num_or, size, _ = weights.shape
    groups = defaultdict(list)
    for ky in range(size):
        for kx in range(size):
            key = tuple(float(weights[c, ky, kx]) for c in range(num_or))
            groups[key].append((ky, kx))
    tap_to_group = {}
    group_keys = []
    for key, taps in groups.items():
        if len(taps) > 1:
            group_keys.append(key)
            for t in taps:
                tap_to_group[t] = key
    return tap_to_group, group_keys


# ----------------------------------------------------------------------------
# Pallas kernel
# ----------------------------------------------------------------------------
def s1_kernel(img_ref, out_ref, *, size, weights):
    """One block of Bg lane-packed slabs per grid step.

    img_ref : VMEM (Bg, Hp, Lp)          shared-halo packed, zero-padded planes
    out_ref : VMEM (Bg * num_or, H, Lp)  packed |gabor| / norm output
    weights : numpy (num_or, size, size), baked in as compile-time constants.
    """
    Bg, Hp, Lp = img_ref.shape
    H = out_ref.shape[1]
    num_or = weights.shape[0]
    tap_to_group, group_keys = _group_taps(weights)

    def one_slab(b, carry):
        img = img_ref[b]                              # (Hp, Lp)

        # --- norm: separable size x size box filter of img**2 ---------------
        # Square once, horizontal sum via XLU lane rolls (co-issue next to the
        # VPU work below), vertical sum via sublane-slice adds.
        sq = img * img                                # (Hp, Lp)
        hs = sq
        for kx in range(1, size):
            hs = hs + pltpu.roll(sq, Lp - kx, axis=1)
        norm_acc = hs[0:H, :]                         # (H, Lp)
        for ky in range(1, size):
            norm_acc = norm_acc + hs[ky:ky + H, :]

        # --- Gabor cross-correlation (Conv2d semantics, no kernel flip) -----
        # kx outermost: one XLU lane roll per kx; rolled[:, j] == img[:, j+kx]
        # for every kept lane (shared zero gaps keep windows inside an image).
        accs = [None] * num_or
        gsums = {key: None for key in group_keys}
        for kx in range(size):
            img_kx = img if kx == 0 else pltpu.roll(img, Lp - kx, axis=1)
            for ky in range(size):
                win = img_kx[ky:ky + H, :]            # (H, Lp) sublane slice
                gkey = tap_to_group.get((ky, kx))
                if gkey is not None:                  # factored (corner) taps
                    prev = gsums[gkey]
                    gsums[gkey] = win if prev is None else prev + win
                else:
                    for c in range(num_or):
                        w = float(weights[c, ky, kx])  # compile-time constant
                        if w == 0.0:
                            continue
                        t = win * w
                        accs[c] = t if accs[c] is None else accs[c] + t
        for gkey in group_keys:                        # finish factored groups
            s = gsums[gkey]
            for c in range(num_or):
                w = gkey[c]
                if w == 0.0:
                    continue
                t = s * w
                accs[c] = t if accs[c] is None else accs[c] + t

        # --- epilogue: clamp(sum==0 -> 1), one EUP rsqrt, num_or vmuls -------
        safe = jnp.where(norm_acc == 0.0, jnp.float32(1.0), norm_acc)
        inv_norm = lax.rsqrt(safe)
        for c in range(num_or):
            a = accs[c] if accs[c] is not None else jnp.zeros((H, Lp), jnp.float32)
            out_ref[b * num_or + c] = jnp.abs(a) * inv_norm
        return carry

    lax.fori_loop(0, Bg, one_slab, 0)


# ----------------------------------------------------------------------------
# Wrapper
# ----------------------------------------------------------------------------
def s1_forward(img, gabor_w, size, max_block_slabs=8):
    """img: (N, 1, H, W) float32; gabor_w: numpy (num_or, size, size); size odd."""
    N, C, H, W = img.shape
    assert C == 1
    assert size % 2 == 1, "odd Gabor sizes only (padding = size // 2)"
    num_or = gabor_w.shape[0]
    pad = size // 2
    Hp = H + 2 * pad

    # Shared-halo lane packing: stride S = W + pad per image, one extra `pad`
    # of zeros at the slab's left edge; image g's real column w sits at lane
    # pad + g*S + w, and its output column w at lane g*S + w.
    S = W + pad
    G = max(1, (128 - pad) // S)            # images per packed slab
    used = pad + G * S
    Lp = -(-used // 128) * 128              # lane width, multiple of 128

    NG = -(-N // G)                         # number of slabs
    Npad_imgs = NG * G

    # Batch Bg slabs per grid step (amortize per-step overhead) but keep at
    # least 2 grid steps when possible so the v7x megacore gets both TCs busy.
    Bg = min(max_block_slabs, NG)
    if NG > 1:
        Bg = min(Bg, -(-NG // 2))
    NB = -(-NG // Bg)
    NGpad = NB * Bg

    x = img[:, 0].astype(jnp.float32)                                # (N, H, W)
    x = jnp.pad(x, ((0, Npad_imgs - N), (0, 0), (0, pad)))           # (Npad, H, S)
    x = x.reshape(NG, G, H, S).transpose(0, 2, 1, 3).reshape(NG, H, G * S)
    x = jnp.pad(x, ((0, NGpad - NG), (pad, pad), (pad, Lp - pad - G * S)))
    # -> (NGpad, Hp, Lp)

    kernel = functools.partial(
        s1_kernel, size=size, weights=np.asarray(gabor_w, dtype=np.float32))

    out_packed = pl.pallas_call(
        kernel,
        out_shape=jax.ShapeDtypeStruct((NGpad * num_or, H, Lp), jnp.float32),
        grid=(NB,),
        in_specs=[
            pl.BlockSpec((Bg, Hp, Lp), lambda n: (n, 0, 0)),
        ],
        out_specs=pl.BlockSpec((Bg * num_or, H, Lp), lambda n: (n, 0, 0)),
        compiler_params=pltpu.CompilerParams(
            dimension_semantics=("parallel",)),
    )(x)

    # Unpack: output column w of slab-local image g sits at lane g*S + w.
    # TODO(synk): if the next HMAX stage is also a Pallas kernel, keep this
    # packed (slab, H, Lp) layout end-to-end instead of repacking per stage.
    out = out_packed.reshape(NGpad, num_or, H, Lp)[:NG, ..., :G * S]
    out = out.reshape(NG, num_or, H, G, S)[..., :W]
    out = out.transpose(0, 3, 1, 2, 4).reshape(Npad_imgs, num_or, H, W)
    return out[:N]


# Pure-JAX reference for validation.
def s1_reference(img, gabor_w, size):
    pad = size // 2
    dn = ("NCHW", "OIHW", "NCHW")
    gout = jax.lax.conv_general_dilated(
        img, gabor_w[:, None], (1, 1), [(pad, pad), (pad, pad)],
        dimension_numbers=dn, precision=jax.lax.Precision.HIGHEST)
    uw = jnp.ones((gabor_w.shape[0], 1, size, size), jnp.float32)
    norm = jnp.sqrt(jax.lax.conv_general_dilated(
        img ** 2, uw, (1, 1), [(pad, pad), (pad, pad)],
        dimension_numbers=dn, precision=jax.lax.Precision.HIGHEST))
    norm = jnp.where(norm == 0.0, 1.0, norm)
    return jnp.abs(gout) / norm


if __name__ == "__main__":
    size = 7
    wavelength = 4.0
    gabor_w = make_gabor_weights(size, wavelength)  # numpy (4, 7, 7)

    key = jax.random.PRNGKey(0)

    # Small case (matches the module's implied shapes): batch=2, 1x16x16.
    x = jax.random.normal(key, (2, 1, 16, 16), dtype=jnp.float32)
    out = jax.block_until_ready(s1_forward(x, gabor_w, size))
    ref = jax.block_until_ready(s1_reference(x, jnp.asarray(gabor_w), size))
    np.testing.assert_allclose(np.asarray(out), np.asarray(ref),
                               rtol=1e-4, atol=1e-4)

    # Slightly larger batch to exercise multi-slab packing, the in-kernel
    # fori_loop over Bg slabs, and the >=2-grid-step (megacore) path.
    x2 = jax.random.normal(jax.random.PRNGKey(1), (16, 1, 16, 16),
                           dtype=jnp.float32)
    out2 = jax.block_until_ready(s1_forward(x2, gabor_w, size))
    ref2 = jax.block_until_ready(s1_reference(x2, jnp.asarray(gabor_w), size))
    np.testing.assert_allclose(np.asarray(out2), np.asarray(ref2),
                               rtol=1e-4, atol=1e-4)

    print("KERNEL_OK")
</pallas_src>

<mosaic_0001>
module attributes {stable_mosaic.version = 11 : i64} {
  func.func @s1_kernel(%arg0: i32, %arg1: memref<1x22x128xf32, #tpu.memory_space<vmem>>, %arg2: memref<4x16x128xf32, #tpu.memory_space<vmem>>) attributes {dimension_semantics = [#tpu.dimension_semantics<parallel>], iteration_bounds = array<i64: 1>, scalar_prefetch = 0 : i64, scratch_operands = 0 : i64, tpu.core_type = #tpu.core_type<tc>, window_params = [{transform_indices = @transform_0, window_bounds = array<i64: 1, 22, 128>}, {transform_indices = @transform_1, window_bounds = array<i64: 4, 16, 128>}]} {
    %c0_i32 = arith.constant 0 : i32
    %0 = arith.index_cast %c0_i32 : i32 to index
    %c0 = arith.constant 0 : index
    %c0_0 = arith.constant 0 : index
    %1 = vector.load %arg1[%0, %c0, %c0_0] : memref<1x22x128xf32, #tpu.memory_space<vmem>>, vector<1x22x128xf32>
    %2 = vector.shape_cast %1 : vector<1x22x128xf32> to vector<22x128xf32>
    %3 = arith.mulf %2, %2 : vector<22x128xf32>
    %c127_i32 = arith.constant 127 : i32
    %4 = tpu.dynamic_rotate %3 by %c127_i32 dim 1 : vector<22x128xf32>, i32 -> vector<22x128xf32>
    %5 = arith.addf %3, %4 : vector<22x128xf32>
    %c126_i32 = arith.constant 126 : i32
    %6 = tpu.dynamic_rotate %3 by %c126_i32 dim 1 : vector<22x128xf32>, i32 -> vector<22x128xf32>
    %7 = arith.addf %5, %6 : vector<22x128xf32>
    %c125_i32 = arith.constant 125 : i32
    %8 = tpu.dynamic_rotate %3 by %c125_i32 dim 1 : vector<22x128xf32>, i32 -> vector<22x128xf32>
    %9 = arith.addf %7, %8 : vector<22x128xf32>
    %c124_i32 = arith.constant 124 : i32
    %10 = tpu.dynamic_rotate %3 by %c124_i32 dim 1 : vector<22x128xf32>, i32 -> vector<22x128xf32>
    %11 = arith.addf %9, %10 : vector<22x128xf32>
    %c123_i32 = arith.constant 123 : i32
    %12 = tpu.dynamic_rotate %3 by %c123_i32 dim 1 : vector<22x128xf32>, i32 -> vector<22x128xf32>
    %13 = arith.addf %11, %12 : vector<22x128xf32>
    %c122_i32 = arith.constant 122 : i32
    %14 = tpu.dynamic_rotate %3 by %c122_i32 dim 1 : vector<22x128xf32>, i32 -> vector<22x128xf32>
    %15 = arith.addf %13, %14 : vector<22x128xf32>
    %16 = vector.extract_strided_slice %15 {offsets = [0, 0], sizes = [16, 128], strides = [1, 1]} : vector<22x128xf32> to vector<16x128xf32>
    %17 = vector.extract_strided_slice %15 {offsets = [1, 0], sizes = [16, 128], strides = [1, 1]} : vector<22x128xf32> to vector<16x128xf32>
    %18 = arith.addf %16, %17 : vector<16x128xf32>
    %19 = vector.extract_strided_slice %15 {offsets = [2, 0], sizes = [16, 128], strides = [1, 1]} : vector<22x128xf32> to vector<16x128xf32>
    %20 = arith.addf %18, %19 : vector<16x128xf32>
    %21 = vector.extract_strided_slice %15 {offsets = [3, 0], sizes = [16, 128], strides = [1, 1]} : vector<22x128xf32> to vector<16x128xf32>
    %22 = arith.addf %20, %21 : vector<16x128xf32>
    %23 = vector.extract_strided_slice %15 {offsets = [4, 0], sizes = [16, 128], strides = [1, 1]} : vector<22x128xf32> to vector<16x128xf32>
    %24 = arith.addf %22, %23 : vector<16x128xf32>
    %25 = vector.extract_strided_slice %15 {offsets = [5, 0], sizes = [16, 128], strides = [1, 1]} : vector<22x128xf32> to vector<16x128xf32>
    %26 = arith.addf %24, %25 : vector<16x128xf32>
    %27 = vector.extract_strided_slice %15 {offsets = [6, 0], sizes = [16, 128], strides = [1, 1]} : vector<22x128xf32> to vector<16x128xf32>
    %28 = arith.addf %26, %27 : vector<16x128xf32>
    %29 = vector.extract_strided_slice %2 {offsets = [0, 0], sizes = [16, 128], strides = [1, 1]} : vector<22x128xf32> to vector<16x128xf32>
    %30 = vector.extract_strided_slice %2 {offsets = [1, 0], sizes = [16, 128], strides = [1, 1]} : vector<22x128xf32> to vector<16x128xf32>
    %31 = arith.addf %29, %30 : vector<16x128xf32>
    %32 = vector.extract_strided_slice %2 {offsets = [2, 0], sizes = [16, 128], strides = [1, 1]} : vector<22x128xf32> to vector<16x128xf32>
    %33 = vector.extract_strided_slice %2 {offsets = [3, 0], sizes = [16, 128], strides = [1, 1]} : vector<22x128xf32> to vector<16x128xf32>
    %34 = vector.extract_strided_slice %2 {offsets = [4, 0], sizes = [16, 128], strides = [1, 1]} : vector<22x128xf32> to vector<16x128xf32>
    %35 = vector.extract_strided_slice %2 {offsets = [5, 0], sizes = [16, 128], strides = [1, 1]} : vector<22x128xf32> to vector<16x128xf32>
    %36 = arith.addf %31, %35 : vector<16x128xf32>
    %37 = vector.extract_strided_slice %2 {offsets = [6, 0], sizes = [16, 128], strides = [1, 1]} : vector<22x128xf32> to vector<16x128xf32>
    %38 = arith.addf %36, %37 : vector<16x128xf32>
    %c127_i32_1 = arith.constant 127 : i32
    %39 = tpu.dynamic_rotate %2 by %c127_i32_1 dim 1 : vector<22x128xf32>, i32 -> vector<22x128xf32>
    %40 = vector.extract_strided_slice %39 {offsets = [0, 0], sizes = [16, 128], strides = [1, 1]} : vector<22x128xf32> to vector<16x128xf32>
    %41 = arith.addf %38, %40 : vector<16x128xf32>
    %42 = vector.extract_strided_slice %39 {offsets = [1, 0], sizes = [16, 128], strides = [1, 1]} : vector<22x128xf32> to vector<16x128xf32>
    %43 = vector.extract_strided_slice %39 {offsets = [2, 0], sizes = [16, 128], strides = [1, 1]} : vector<22x128xf32> to vector<16x128xf32>
    %44 = vector.extract_strided_slice %39 {offsets = [3, 0], sizes = [16, 128], strides = [1, 1]} : vector<22x128xf32> to vector<16x128xf32>
    %45 = vector.extract_strided_slice %39 {offsets = [4, 0], sizes = [16, 128], strides = [1, 1]} : vector<22x128xf32> to vector<16x128xf32>
    %46 = vector.extract_strided_slice %39 {offsets = [5, 0], sizes = [16, 128], strides = [1, 1]} : vector<22x128xf32> to vector<16x128xf32>
    %47 = vector.extract_strided_slice %39 {offsets = [6, 0], sizes = [16, 128], strides = [1, 1]} : vector<22x128xf32> to vector<16x128xf32>
    %48 = arith.addf %41, %47 : vector<16x128xf32>
    %c126_i32_2 = arith.constant 126 : i32
    %49 = tpu.dynamic_rotate %2 by %c126_i32_2 dim 1 : vector<22x128xf32>, i32 -> vector<22x128xf32>
    %50 = vector.extract_strided_slice %49 {offsets = [0, 0], sizes = [16, 128], strides = [1, 1]} : vector<22x128xf32> to vector<16x128xf32>
    %51 = vector.extract_strided_slice %49 {offsets = [1, 0], sizes = [16, 128], strides = [1, 1]} : vector<22x128xf32> to vector<16x128xf32>
    %52 = vector.extract_strided_slice %49 {offsets = [2, 0], sizes = [16, 128], strides = [1, 1]} : vector<22x128xf32> to vector<16x128xf32>
    %53 = vector.extract_strided_slice %49 {offsets = [3, 0], sizes = [16, 128], strides = [1, 1]} : vector<22x128xf32> to vector<16x128xf32>
    %54 = vector.extract_strided_slice %49 {offsets = [4, 0], sizes = [16, 128], strides = [1, 1]} : vector<22x128xf32> to vector<16x128xf32>
    %55 = vector.extract_strided_slice %49 {offsets = [5, 0], sizes = [16, 128], strides = [1, 1]} : vector<22x128xf32> to vector<16x128xf32>
    %56 = vector.extract_strided_slice %49 {offsets = [6, 0], sizes = [16, 128], strides = [1, 1]} : vector<22x128xf32> to vector<16x128xf32>
    %c125_i32_3 = arith.constant 125 : i32
    %57 = tpu.dynamic_rotate %2 by %c125_i32_3 dim 1 : vector<22x128xf32>, i32 -> vector<22x128xf32>
    %58 = vector.extract_strided_slice %57 {offsets = [0, 0], sizes = [16, 128], strides = [1, 1]} : vector<22x128xf32> to vector<16x128xf32>
    %59 = vector.extract_strided_slice %57 {offsets = [1, 0], sizes = [16, 128], strides = [1, 1]} : vector<22x128xf32> to vector<16x128xf32>
    %60 = vector.extract_strided_slice %57 {offsets = [2, 0], sizes = [16, 128], strides = [1, 1]} : vector<22x128xf32> to vector<16x128xf32>
    %61 = vector.extract_strided_slice %57 {offsets = [3, 0], sizes = [16, 128], strides = [1, 1]} : vector<22x128xf32> to vector<16x128xf32>
    %cst = arith.constant 0.284626603 : f32
    %62 = vector.broadcast %cst : f32 to vector<16x128xf32>
    %63 = arith.mulf %61, %62 : vector<16x128xf32>
    %cst_4 = arith.constant 0.293807864 : f32
    %64 = vector.broadcast %cst_4 : f32 to vector<16x128xf32>
    %65 = arith.mulf %61, %64 : vector<16x128xf32>
    %cst_5 = arith.constant 0.284626603 : f32
    %66 = vector.broadcast %cst_5 : f32 to vector<16x128xf32>
    %67 = arith.mulf %61, %66 : vector<16x128xf32>
    %cst_6 = arith.constant 0.293807864 : f32
    %68 = vector.broadcast %cst_6 : f32 to vector<16x128xf32>
    %69 = arith.mulf %61, %68 : vector<16x128xf32>
    %70 = vector.extract_strided_slice %57 {offsets = [4, 0], sizes = [16, 128], strides = [1, 1]} : vector<22x128xf32> to vector<16x128xf32>
    %71 = arith.addf %60, %70 : vector<16x128xf32>
    %72 = vector.extract_strided_slice %57 {offsets = [5, 0], sizes = [16, 128], strides = [1, 1]} : vector<22x128xf32> to vector<16x128xf32>
    %73 = arith.addf %59, %72 : vector<16x128xf32>
    %74 = vector.extract_strided_slice %57 {offsets = [6, 0], sizes = [16, 128], strides = [1, 1]} : vector<22x128xf32> to vector<16x128xf32>
    %75 = arith.addf %58, %74 : vector<16x128xf32>
    %c124_i32_7 = arith.constant 124 : i32
    %76 = tpu.dynamic_rotate %2 by %c124_i32_7 dim 1 : vector<22x128xf32>, i32 -> vector<22x128xf32>
    %77 = vector.extract_strided_slice %76 {offsets = [0, 0], sizes = [16, 128], strides = [1, 1]} : vector<22x128xf32> to vector<16x128xf32>
    %78 = arith.addf %56, %77 : vector<16x128xf32>
    %79 = vector.extract_strided_slice %76 {offsets = [1, 0], sizes = [16, 128], strides = [1, 1]} : vector<22x128xf32> to vector<16x128xf32>
    %80 = arith.addf %55, %79 : vector<16x128xf32>
    %81 = vector.extract_strided_slice %76 {offsets = [2, 0], sizes = [16, 128], strides = [1, 1]} : vector<22x128xf32> to vector<16x128xf32>
    %82 = arith.addf %54, %81 : vector<16x128xf32>
    %83 = vector.extract_strided_slice %76 {offsets = [3, 0], sizes = [16, 128], strides = [1, 1]} : vector<22x128xf32> to vector<16x128xf32>
    %84 = arith.addf %53, %83 : vector<16x128xf32>
    %85 = vector.extract_strided_slice %76 {offsets = [4, 0], sizes = [16, 128], strides = [1, 1]} : vector<22x128xf32> to vector<16x128xf32>
    %86 = arith.addf %52, %85 : vector<16x128xf32>
    %87 = vector.extract_strided_slice %76 {offsets = [5, 0], sizes = [16, 128], strides = [1, 1]} : vector<22x128xf32> to vector<16x128xf32>
    %88 = arith.addf %51, %87 : vector<16x128xf32>
    %89 = vector.extract_strided_slice %76 {offsets = [6, 0], sizes = [16, 128], strides = [1, 1]} : vector<22x128xf32> to vector<16x128xf32>
    %90 = arith.addf %50, %89 : vector<16x128xf32>
    %c123_i32_8 = arith.constant 123 : i32
    %91 = tpu.dynamic_rotate %2 by %c123_i32_8 dim 1 : vector<22x128xf32>, i32 -> vector<22x128xf32>
    %92 = vector.extract_strided_slice %91 {offsets = [0, 0], sizes = [16, 128], strides = [1, 1]} : vector<22x128xf32> to vector<16x128xf32>
    %93 = arith.addf %48, %92 : vector<16x128xf32>
    %94 = vector.extract_strided_slice %91 {offsets = [1, 0], sizes = [16, 128], strides = [1, 1]} : vector<22x128xf32> to vector<16x128xf32>
    %95 = arith.addf %46, %94 : vector<16x128xf32>
    %96 = vector.extract_strided_slice %91 {offsets = [2, 0], sizes = [16, 128], strides = [1, 1]} : vector<22x128xf32> to vector<16x128xf32>
    %97 = arith.addf %45, %96 : vector<16x128xf32>
    %98 = vector.extract_strided_slice %91 {offsets = [3, 0], sizes = [16, 128], strides = [1, 1]} : vector<22x128xf32> to vector<16x128xf32>
    %99 = arith.addf %44, %98 : vector<16x128xf32>
    %100 = vector.extract_strided_slice %91 {offsets = [4, 0], sizes = [16, 128], strides = [1, 1]} : vector<22x128xf32> to vector<16x128xf32>
    %101 = arith.addf %43, %100 : vector<16x128xf32>
    %102 = vector.extract_strided_slice %91 {offsets = [5, 0], sizes = [16, 128], strides = [1, 1]} : vector<22x128xf32> to vector<16x128xf32>
    %103 = arith.addf %42, %102 : vector<16x128xf32>
    %104 = vector.extract_strided_slice %91 {offsets = [6, 0], sizes = [16, 128], strides = [1, 1]} : vector<22x128xf32> to vector<16x128xf32>
    %105 = arith.addf %93, %104 : vector<16x128xf32>
    %c122_i32_9 = arith.constant 122 : i32
    %106 = tpu.dynamic_rotate %2 by %c122_i32_9 dim 1 : vector<22x128xf32>, i32 -> vector<22x128xf32>
    %107 = vector.extract_strided_slice %106 {offsets = [0, 0], sizes = [16, 128], strides = [1, 1]} : vector<22x128xf32> to vector<16x128xf32>
    %108 = arith.addf %105, %107 : vector<16x128xf32>
    %109 = vector.extract_strided_slice %106 {offsets = [1, 0], sizes = [16, 128], strides = [1, 1]} : vector<22x128xf32> to vector<16x128xf32>
    %110 = arith.addf %108, %109 : vector<16x128xf32>
    %111 = vector.extract_strided_slice %106 {offsets = [2, 0], sizes = [16, 128], strides = [1, 1]} : vector<22x128xf32> to vector<16x128xf32>
    %112 = arith.addf %34, %111 : vector<16x128xf32>
    %113 = vector.extract_strided_slice %106 {offsets = [3, 0], sizes = [16, 128], strides = [1, 1]} : vector<22x128xf32> to vector<16x128xf32>
    %114 = arith.addf %33, %113 : vector<16x128xf32>
    %115 = vector.extract_strided_slice %106 {offsets = [4, 0], sizes = [16, 128], strides = [1, 1]} : vector<22x128xf32> to vector<16x128xf32>
    %116 = arith.addf %32, %115 : vector<16x128xf32>
    %117 = vector.extract_strided_slice %106 {offsets = [5, 0], sizes = [16, 128], strides = [1, 1]} : vector<22x128xf32> to vector<16x128xf32>
    %118 = arith.addf %110, %117 : vector<16x128xf32>
    %119 = vector.extract_strided_slice %106 {offsets = [6, 0], sizes = [16, 128], strides = [1, 1]} : vector<22x128xf32> to vector<16x128xf32>
    %120 = arith.addf %118, %119 : vector<16x128xf32>
    %cst_10 = arith.constant 4.668450e-03 : f32
    %121 = vector.broadcast %cst_10 : f32 to vector<16x128xf32>
    %122 = arith.mulf %120, %121 : vector<16x128xf32>
    %123 = arith.addf %63, %122 : vector<16x128xf32>
    %cst_11 = arith.constant 0.0185802113 : f32
    %124 = vector.broadcast %cst_11 : f32 to vector<16x128xf32>
    %125 = arith.mulf %120, %124 : vector<16x128xf32>
    %126 = arith.addf %65, %125 : vector<16x128xf32>
    %cst_12 = arith.constant 4.668450e-03 : f32
    %127 = vector.broadcast %cst_12 : f32 to vector<16x128xf32>
    %128 = arith.mulf %120, %127 : vector<16x128xf32>
    %129 = arith.addf %67, %128 : vector<16x128xf32>
    %cst_13 = arith.constant 0.0185802113 : f32
    %130 = vector.broadcast %cst_13 : f32 to vector<16x128xf32>
    %131 = arith.mulf %120, %130 : vector<16x128xf32>
    %132 = arith.addf %69, %131 : vector<16x128xf32>
    %cst_14 = arith.constant 0.102426723 : f32
    %133 = vector.broadcast %cst_14 : f32 to vector<16x128xf32>
    %134 = arith.mulf %90, %133 : vector<16x128xf32>
    %135 = arith.addf %123, %134 : vector<16x128xf32>
    %cst_15 = arith.constant 0.0769182593 : f32
    %136 = vector.broadcast %cst_15 : f32 to vector<16x128xf32>
    %137 = arith.mulf %90, %136 : vector<16x128xf32>
    %138 = arith.addf %126, %137 : vector<16x128xf32>
    %cst_16 = arith.constant -0.0508365072 : f32
    %139 = vector.broadcast %cst_16 : f32 to vector<16x128xf32>
    %140 = arith.mulf %90, %139 : vector<16x128xf32>
    %141 = arith.addf %129, %140 : vector<16x128xf32>
    %cst_17 = arith.constant -1.720320e-01 : f32
    %142 = vector.broadcast %cst_17 : f32 to vector<16x128xf32>
    %143 = arith.mulf %90, %142 : vector<16x128xf32>
    %144 = arith.addf %132, %143 : vector<16x128xf32>
    %cst_18 = arith.constant 0.10298945 : f32
    %145 = vector.broadcast %cst_18 : f32 to vector<16x128xf32>
    %146 = arith.mulf %75, %145 : vector<16x128xf32>
    %147 = arith.addf %135, %146 : vector<16x128xf32>
    %cst_19 = arith.constant -0.139625475 : f32
    %148 = vector.broadcast %cst_19 : f32 to vector<16x128xf32>
    %149 = arith.mulf %75, %148 : vector<16x128xf32>
    %150 = arith.addf %138, %149 : vector<16x128xf32>
    %cst_20 = arith.constant 0.270531654 : f32
    %151 = vector.broadcast %cst_20 : f32 to vector<16x128xf32>
    %152 = arith.mulf %75, %151 : vector<16x128xf32>
    %153 = arith.addf %141, %152 : vector<16x128xf32>
    %cst_21 = arith.constant -0.139625475 : f32
    %154 = vector.broadcast %cst_21 : f32 to vector<16x128xf32>
    %155 = arith.mulf %75, %154 : vector<16x128xf32>
    %156 = arith.addf %144, %155 : vector<16x128xf32>
    %cst_22 = arith.constant 0.102426723 : f32
    %157 = vector.broadcast %cst_22 : f32 to vector<16x128xf32>
    %158 = arith.mulf %78, %157 : vector<16x128xf32>
    %159 = arith.addf %147, %158 : vector<16x128xf32>
    %cst_23 = arith.constant -1.720320e-01 : f32
    %160 = vector.broadcast %cst_23 : f32 to vector<16x128xf32>
    %161 = arith.mulf %78, %160 : vector<16x128xf32>
    %162 = arith.addf %150, %161 : vector<16x128xf32>
    %cst_24 = arith.constant -0.0508365072 : f32
    %163 = vector.broadcast %cst_24 : f32 to vector<16x128xf32>
    %164 = arith.mulf %78, %163 : vector<16x128xf32>
    %165 = arith.addf %153, %164 : vector<16x128xf32>
    %cst_25 = arith.constant 0.0769182593 : f32
    %166 = vector.broadcast %cst_25 : f32 to vector<16x128xf32>
    %167 = arith.mulf %78, %166 : vector<16x128xf32>
    %168 = arith.addf %156, %167 : vector<16x128xf32>
    %cst_26 = arith.constant -0.186335534 : f32
    %169 = vector.broadcast %cst_26 : f32 to vector<16x128xf32>
    %170 = arith.mulf %103, %169 : vector<16x128xf32>
    %171 = arith.addf %159, %170 : vector<16x128xf32>
    %cst_27 = arith.constant 0.0775918141 : f32
    %172 = vector.broadcast %cst_27 : f32 to vector<16x128xf32>
    %173 = arith.mulf %103, %172 : vector<16x128xf32>
    %174 = arith.addf %162, %173 : vector<16x128xf32>
    %cst_28 = arith.constant -0.186335534 : f32
    %175 = vector.broadcast %cst_28 : f32 to vector<16x128xf32>
    %176 = arith.mulf %103, %175 : vector<16x128xf32>
    %177 = arith.addf %165, %176 : vector<16x128xf32>
    %cst_29 = arith.constant 0.281455636 : f32
    %178 = vector.broadcast %cst_29 : f32 to vector<16x128xf32>
    %179 = arith.mulf %103, %178 : vector<16x128xf32>
    %180 = arith.addf %168, %179 : vector<16x128xf32>
    %cst_30 = arith.constant -0.189652979 : f32
    %181 = vector.broadcast %cst_30 : f32 to vector<16x128xf32>
    %182 = arith.mulf %88, %181 : vector<16x128xf32>
    %183 = arith.addf %171, %182 : vector<16x128xf32>
    %cst_31 = arith.constant -0.143299758 : f32
    %184 = vector.broadcast %cst_31 : f32 to vector<16x128xf32>
    %185 = arith.mulf %88, %184 : vector<16x128xf32>
    %186 = arith.addf %174, %185 : vector<16x128xf32>
    %cst_32 = arith.constant -0.0524525195 : f32
    %187 = vector.broadcast %cst_32 : f32 to vector<16x128xf32>
    %188 = arith.mulf %88, %187 : vector<16x128xf32>
    %189 = arith.addf %177, %188 : vector<16x128xf32>
    %cst_33 = arith.constant 0.0957017168 : f32
    %190 = vector.broadcast %cst_33 : f32 to vector<16x128xf32>
    %191 = arith.mulf %88, %190 : vector<16x128xf32>
    %192 = arith.addf %180, %191 : vector<16x128xf32>
    %cst_34 = arith.constant -0.190771565 : f32
    %193 = vector.broadcast %cst_34 : f32 to vector<16x128xf32>
    %194 = arith.mulf %73, %193 : vector<16x128xf32>
    %195 = arith.addf %183, %194 : vector<16x128xf32>
    %cst_35 = arith.constant -0.178710788 : f32
    %196 = vector.broadcast %cst_35 : f32 to vector<16x128xf32>
    %197 = arith.mulf %73, %196 : vector<16x128xf32>
    %198 = arith.addf %186, %197 : vector<16x128xf32>
    %cst_36 = arith.constant 0.278272212 : f32
    %199 = vector.broadcast %cst_36 : f32 to vector<16x128xf32>
    %200 = arith.mulf %73, %199 : vector<16x128xf32>
    %201 = arith.addf %189, %200 : vector<16x128xf32>
    %cst_37 = arith.constant -0.178710788 : f32
    %202 = vector.broadcast %cst_37 : f32 to vector<16x128xf32>
    %203 = arith.mulf %73, %202 : vector<16x128xf32>
    %204 = arith.addf %192, %203 : vector<16x128xf32>
    %cst_38 = arith.constant -0.189652979 : f32
    %205 = vector.broadcast %cst_38 : f32 to vector<16x128xf32>
    %206 = arith.mulf %80, %205 : vector<16x128xf32>
    %207 = arith.addf %195, %206 : vector<16x128xf32>
    %cst_39 = arith.constant 0.0957017168 : f32
    %208 = vector.broadcast %cst_39 : f32 to vector<16x128xf32>
    %209 = arith.mulf %80, %208 : vector<16x128xf32>
    %210 = arith.addf %198, %209 : vector<16x128xf32>
    %cst_40 = arith.constant -0.0524525195 : f32
    %211 = vector.broadcast %cst_40 : f32 to vector<16x128xf32>
    %212 = arith.mulf %80, %211 : vector<16x128xf32>
    %213 = arith.addf %201, %212 : vector<16x128xf32>
    %cst_41 = arith.constant -0.143299758 : f32
    %214 = vector.broadcast %cst_41 : f32 to vector<16x128xf32>
    %215 = arith.mulf %80, %214 : vector<16x128xf32>
    %216 = arith.addf %204, %215 : vector<16x128xf32>
    %cst_42 = arith.constant -0.186335534 : f32
    %217 = vector.broadcast %cst_42 : f32 to vector<16x128xf32>
    %218 = arith.mulf %95, %217 : vector<16x128xf32>
    %219 = arith.addf %207, %218 : vector<16x128xf32>
    %cst_43 = arith.constant 0.281455636 : f32
    %220 = vector.broadcast %cst_43 : f32 to vector<16x128xf32>
    %221 = arith.mulf %95, %220 : vector<16x128xf32>
    %222 = arith.addf %210, %221 : vector<16x128xf32>
    %cst_44 = arith.constant -0.186335534 : f32
    %223 = vector.broadcast %cst_44 : f32 to vector<16x128xf32>
    %224 = arith.mulf %95, %223 : vector<16x128xf32>
    %225 = arith.addf %213, %224 : vector<16x128xf32>
    %cst_45 = arith.constant 0.0775918141 : f32
    %226 = vector.broadcast %cst_45 : f32 to vector<16x128xf32>
    %227 = arith.mulf %95, %226 : vector<16x128xf32>
    %228 = arith.addf %216, %227 : vector<16x128xf32>
    %cst_46 = arith.constant -0.0508365072 : f32
    %229 = vector.broadcast %cst_46 : f32 to vector<16x128xf32>
    %230 = arith.mulf %116, %229 : vector<16x128xf32>
    %231 = arith.addf %219, %230 : vector<16x128xf32>
    %cst_47 = arith.constant 0.0769182593 : f32
    %232 = vector.broadcast %cst_47 : f32 to vector<16x128xf32>
    %233 = arith.mulf %116, %232 : vector<16x128xf32>
    %234 = arith.addf %222, %233 : vector<16x128xf32>
    %cst_48 = arith.constant 0.102426723 : f32
    %235 = vector.broadcast %cst_48 : f32 to vector<16x128xf32>
    %236 = arith.mulf %116, %235 : vector<16x128xf32>
    %237 = arith.addf %225, %236 : vector<16x128xf32>
    %cst_49 = arith.constant -1.720320e-01 : f32
    %238 = vector.broadcast %cst_49 : f32 to vector<16x128xf32>
    %239 = arith.mulf %116, %238 : vector<16x128xf32>
    %240 = arith.addf %228, %239 : vector<16x128xf32>
    %cst_50 = arith.constant -0.0524525195 : f32
    %241 = vector.broadcast %cst_50 : f32 to vector<16x128xf32>
    %242 = arith.mulf %101, %241 : vector<16x128xf32>
    %243 = arith.addf %231, %242 : vector<16x128xf32>
    %cst_51 = arith.constant -0.143299758 : f32
    %244 = vector.broadcast %cst_51 : f32 to vector<16x128xf32>
    %245 = arith.mulf %101, %244 : vector<16x128xf32>
    %246 = arith.addf %234, %245 : vector<16x128xf32>
    %cst_52 = arith.constant -0.189652979 : f32
    %247 = vector.broadcast %cst_52 : f32 to vector<16x128xf32>
    %248 = arith.mulf %101, %247 : vector<16x128xf32>
    %249 = arith.addf %237, %248 : vector<16x128xf32>
    %cst_53 = arith.constant 0.0957017168 : f32
    %250 = vector.broadcast %cst_53 : f32 to vector<16x128xf32>
    %251 = arith.mulf %101, %250 : vector<16x128xf32>
    %252 = arith.addf %240, %251 : vector<16x128xf32>
    %cst_54 = arith.constant -0.0534446239 : f32
    %253 = vector.broadcast %cst_54 : f32 to vector<16x128xf32>
    %254 = arith.mulf %86, %253 : vector<16x128xf32>
    %255 = arith.addf %243, %254 : vector<16x128xf32>
    %cst_55 = arith.constant -0.180988669 : f32
    %256 = vector.broadcast %cst_55 : f32 to vector<16x128xf32>
    %257 = arith.mulf %86, %256 : vector<16x128xf32>
    %258 = arith.addf %246, %257 : vector<16x128xf32>
    %cst_56 = arith.constant -0.0534446239 : f32
    %259 = vector.broadcast %cst_56 : f32 to vector<16x128xf32>
    %260 = arith.mulf %86, %259 : vector<16x128xf32>
    %261 = arith.addf %249, %260 : vector<16x128xf32>
    %cst_57 = arith.constant 0.290666431 : f32
    %262 = vector.broadcast %cst_57 : f32 to vector<16x128xf32>
    %263 = arith.mulf %86, %262 : vector<16x128xf32>
    %264 = arith.addf %252, %263 : vector<16x128xf32>
    %cst_58 = arith.constant -0.0537791401 : f32
    %265 = vector.broadcast %cst_58 : f32 to vector<16x128xf32>
    %266 = arith.mulf %71, %265 : vector<16x128xf32>
    %267 = arith.addf %255, %266 : vector<16x128xf32>
    %cst_59 = arith.constant 0.0974928513 : f32
    %268 = vector.broadcast %cst_59 : f32 to vector<16x128xf32>
    %269 = arith.mulf %71, %268 : vector<16x128xf32>
    %270 = arith.addf %258, %269 : vector<16x128xf32>
    %cst_60 = arith.constant 0.283024281 : f32
    %271 = vector.broadcast %cst_60 : f32 to vector<16x128xf32>
    %272 = arith.mulf %71, %271 : vector<16x128xf32>
    %273 = arith.addf %261, %272 : vector<16x128xf32>
    %cst_61 = arith.constant 0.0974928513 : f32
    %274 = vector.broadcast %cst_61 : f32 to vector<16x128xf32>
    %275 = arith.mulf %71, %274 : vector<16x128xf32>
    %276 = arith.addf %264, %275 : vector<16x128xf32>
    %cst_62 = arith.constant -0.0534446239 : f32
    %277 = vector.broadcast %cst_62 : f32 to vector<16x128xf32>
    %278 = arith.mulf %82, %277 : vector<16x128xf32>
    %279 = arith.addf %267, %278 : vector<16x128xf32>
    %cst_63 = arith.constant 0.290666431 : f32
    %280 = vector.broadcast %cst_63 : f32 to vector<16x128xf32>
    %281 = arith.mulf %82, %280 : vector<16x128xf32>
    %282 = arith.addf %270, %281 : vector<16x128xf32>
    %cst_64 = arith.constant -0.0534446239 : f32
    %283 = vector.broadcast %cst_64 : f32 to vector<16x128xf32>
    %284 = arith.mulf %82, %283 : vector<16x128xf32>
    %285 = arith.addf %273, %284 : vector<16x128xf32>
    %cst_65 = arith.constant -0.180988669 : f32
    %286 = vector.broadcast %cst_65 : f32 to vector<16x128xf32>
    %287 = arith.mulf %82, %286 : vector<16x128xf32>
    %288 = arith.addf %276, %287 : vector<16x128xf32>
    %cst_66 = arith.constant -0.0524525195 : f32
    %289 = vector.broadcast %cst_66 : f32 to vector<16x128xf32>
    %290 = arith.mulf %97, %289 : vector<16x128xf32>
    %291 = arith.addf %279, %290 : vector<16x128xf32>
    %cst_67 = arith.constant 0.0957017168 : f32
    %292 = vector.broadcast %cst_67 : f32 to vector<16x128xf32>
    %293 = arith.mulf %97, %292 : vector<16x128xf32>
    %294 = arith.addf %282, %293 : vector<16x128xf32>
    %cst_68 = arith.constant -0.189652979 : f32
    %295 = vector.broadcast %cst_68 : f32 to vector<16x128xf32>
    %296 = arith.mulf %97, %295 : vector<16x128xf32>
    %297 = arith.addf %285, %296 : vector<16x128xf32>
    %cst_69 = arith.constant -0.143299758 : f32
    %298 = vector.broadcast %cst_69 : f32 to vector<16x128xf32>
    %299 = arith.mulf %97, %298 : vector<16x128xf32>
    %300 = arith.addf %288, %299 : vector<16x128xf32>
    %cst_70 = arith.constant -0.0508365072 : f32
    %301 = vector.broadcast %cst_70 : f32 to vector<16x128xf32>
    %302 = arith.mulf %112, %301 : vector<16x128xf32>
    %303 = arith.addf %291, %302 : vector<16x128xf32>
    %cst_71 = arith.constant -1.720320e-01 : f32
    %304 = vector.broadcast %cst_71 : f32 to vector<16x128xf32>
    %305 = arith.mulf %112, %304 : vector<16x128xf32>
    %306 = arith.addf %294, %305 : vector<16x128xf32>
    %cst_72 = arith.constant 0.102426723 : f32
    %307 = vector.broadcast %cst_72 : f32 to vector<16x128xf32>
    %308 = arith.mulf %112, %307 : vector<16x128xf32>
    %309 = arith.addf %297, %308 : vector<16x128xf32>
    %cst_73 = arith.constant 0.0769182593 : f32
    %310 = vector.broadcast %cst_73 : f32 to vector<16x128xf32>
    %311 = arith.mulf %112, %310 : vector<16x128xf32>
    %312 = arith.addf %300, %311 : vector<16x128xf32>
    %cst_74 = arith.constant 0.270531654 : f32
    %313 = vector.broadcast %cst_74 : f32 to vector<16x128xf32>
    %314 = arith.mulf %114, %313 : vector<16x128xf32>
    %315 = arith.addf %303, %314 : vector<16x128xf32>
    %cst_75 = arith.constant -0.139625475 : f32
    %316 = vector.broadcast %cst_75 : f32 to vector<16x128xf32>
    %317 = arith.mulf %114, %316 : vector<16x128xf32>
    %318 = arith.addf %306, %317 : vector<16x128xf32>
    %cst_76 = arith.constant 0.10298945 : f32
    %319 = vector.broadcast %cst_76 : f32 to vector<16x128xf32>
    %320 = arith.mulf %114, %319 : vector<16x128xf32>
    %321 = arith.addf %309, %320 : vector<16x128xf32>
    %cst_77 = arith.constant -0.139625475 : f32
    %322 = vector.broadcast %cst_77 : f32 to vector<16x128xf32>
    %323 = arith.mulf %114, %322 : vector<16x128xf32>
    %324 = arith.addf %312, %323 : vector<16x128xf32>
    %cst_78 = arith.constant 0.278272212 : f32
    %325 = vector.broadcast %cst_78 : f32 to vector<16x128xf32>
    %326 = arith.mulf %99, %325 : vector<16x128xf32>
    %327 = arith.addf %315, %326 : vector<16x128xf32>
    %cst_79 = arith.constant -0.178710788 : f32
    %328 = vector.broadcast %cst_79 : f32 to vector<16x128xf32>
    %329 = arith.mulf %99, %328 : vector<16x128xf32>
    %330 = arith.addf %318, %329 : vector<16x128xf32>
    %cst_80 = arith.constant -0.190771565 : f32
    %331 = vector.broadcast %cst_80 : f32 to vector<16x128xf32>
    %332 = arith.mulf %99, %331 : vector<16x128xf32>
    %333 = arith.addf %321, %332 : vector<16x128xf32>
    %cst_81 = arith.constant -0.178710788 : f32
    %334 = vector.broadcast %cst_81 : f32 to vector<16x128xf32>
    %335 = arith.mulf %99, %334 : vector<16x128xf32>
    %336 = arith.addf %324, %335 : vector<16x128xf32>
    %cst_82 = arith.constant 0.283024281 : f32
    %337 = vector.broadcast %cst_82 : f32 to vector<16x128xf32>
    %338 = arith.mulf %84, %337 : vector<16x128xf32>
    %339 = arith.addf %327, %338 : vector<16x128xf32>
    %cst_83 = arith.constant 0.0974928513 : f32
    %340 = vector.broadcast %cst_83 : f32 to vector<16x128xf32>
    %341 = arith.mulf %84, %340 : vector<16x128xf32>
    %342 = arith.addf %330, %341 : vector<16x128xf32>
    %cst_84 = arith.constant -0.0537791401 : f32
    %343 = vector.broadcast %cst_84 : f32 to vector<16x128xf32>
    %344 = arith.mulf %84, %343 : vector<16x128xf32>
    %345 = arith.addf %333, %344 : vector<16x128xf32>
    %cst_85 = arith.constant 0.0974928513 : f32
    %346 = vector.broadcast %cst_85 : f32 to vector<16x128xf32>
    %347 = arith.mulf %84, %346 : vector<16x128xf32>
    %348 = arith.addf %336, %347 : vector<16x128xf32>
    %cst_86 = arith.constant 0.000000e+00 : f32
    %349 = vector.broadcast %cst_86 : f32 to vector<16x128xf32>
    %350 = arith.cmpf oeq, %28, %349 : vector<16x128xf32>
    %cst_87 = arith.constant 1.000000e+00 : f32
    %351 = vector.broadcast %cst_87 : f32 to vector<16x128xf32>
    %352 = arith.select %350, %351, %28 : vector<16x128xi1>, vector<16x128xf32>
    %353 = math.rsqrt %352 : vector<16x128xf32>
    %354 = math.absf %339 : vector<16x128xf32>
    %355 = arith.mulf %354, %353 : vector<16x128xf32>
    %c4_i32 = arith.constant 4 : i32
    %356 = arith.muli %c0_i32, %c4_i32 : i32
    %c0_i32_88 = arith.constant 0 : i32
    %357 = arith.addi %356, %c0_i32_88 : i32
    %358 = arith.index_cast %357 : i32 to index
    %c0_89 = arith.constant 0 : index
    %c0_90 = arith.constant 0 : index
    %359 = vector.load %arg2[%358, %c0_89, %c0_90] : memref<4x16x128xf32, #tpu.memory_space<vmem>>, vector<1x16x128xf32>
    %360 = vector.shape_cast %359 : vector<1x16x128xf32> to vector<16x128xf32>
    %361 = vector.shape_cast %355 : vector<16x128xf32> to vector<1x16x128xf32>
    tpu.vector_store %arg2[%358, %c0_89, %c0_90], %361 {strides = array<i32>} : memref<4x16x128xf32, #tpu.memory_space<vmem>>, vector<1x16x128xf32>,
    %362 = math.absf %342 : vector<16x128xf32>
    %363 = arith.mulf %362, %353 : vector<16x128xf32>
    %c4_i32_91 = arith.constant 4 : i32
    %364 = arith.muli %c0_i32, %c4_i32_91 : i32
    %c1_i32 = arith.constant 1 : i32
    %365 = arith.addi %364, %c1_i32 : i32
    %366 = arith.index_cast %365 : i32 to index
    %c0_92 = arith.constant 0 : index
    %c0_93 = arith.constant 0 : index
    %367 = vector.load %arg2[%366, %c0_92, %c0_93] : memref<4x16x128xf32, #tpu.memory_space<vmem>>, vector<1x16x128xf32>
    %368 = vector.shape_cast %367 : vector<1x16x128xf32> to vector<16x128xf32>
    %369 = vector.shape_cast %363 : vector<16x128xf32> to vector<1x16x128xf32>
    tpu.vector_store %arg2[%366, %c0_92, %c0_93], %369 {strides = array<i32>} : memref<4x16x128xf32, #tpu.memory_space<vmem>>, vector<1x16x128xf32>,
    %370 = math.absf %345 : vector<16x128xf32>
    %371 = arith.mulf %370, %353 : vector<16x128xf32>
    %c4_i32_94 = arith.constant 4 : i32
    %372 = arith.muli %c0_i32, %c4_i32_94 : i32
    %c2_i32 = arith.constant 2 : i32
    %373 = arith.addi %372, %c2_i32 : i32
    %374 = arith.index_cast %373 : i32 to index
    %c0_95 = arith.constant 0 : index
    %c0_96 = arith.constant 0 : index
    %375 = vector.load %arg2[%374, %c0_95, %c0_96] : memref<4x16x128xf32, #tpu.memory_space<vmem>>, vector<1x16x128xf32>
    %376 = vector.shape_cast %375 : vector<1x16x128xf32> to vector<16x128xf32>
    %377 = vector.shape_cast %371 : vector<16x128xf32> to vector<1x16x128xf32>
    tpu.vector_store %arg2[%374, %c0_95, %c0_96], %377 {strides = array<i32>} : memref<4x16x128xf32, #tpu.memory_space<vmem>>, vector<1x16x128xf32>,
    %378 = math.absf %348 : vector<16x128xf32>
    %379 = arith.mulf %378, %353 : vector<16x128xf32>
    %c4_i32_97 = arith.constant 4 : i32
    %380 = arith.muli %c0_i32, %c4_i32_97 : i32
    %c3_i32 = arith.constant 3 : i32
    %381 = arith.addi %380, %c3_i32 : i32
    %382 = arith.index_cast %381 : i32 to index
    %c0_98 = arith.constant 0 : index
    %c0_99 = arith.constant 0 : index
    %383 = vector.load %arg2[%382, %c0_98, %c0_99] : memref<4x16x128xf32, #tpu.memory_space<vmem>>, vector<1x16x128xf32>
    %384 = vector.shape_cast %383 : vector<1x16x128xf32> to vector<16x128xf32>
    %385 = vector.shape_cast %379 : vector<16x128xf32> to vector<1x16x128xf32>
    tpu.vector_store %arg2[%382, %c0_98, %c0_99], %385 {strides = array<i32>} : memref<4x16x128xf32, #tpu.memory_space<vmem>>, vector<1x16x128xf32>,
    %c1_i32_100 = arith.constant 1 : i32
    return
  }
  func.func @transform_0(%arg0: i32) -> (i32, i32, i32) {
    %c0_i32 = arith.constant 0 : i32
    %c0_i32_0 = arith.constant 0 : i32
    %c0_i32_1 = arith.constant 0 : i32
    return %arg0, %c0_i32, %c0_i32_0 : i32, i32, i32
  }
  func.func @transform_1(%arg0: i32) -> (i32, i32, i32) {
    %c0_i32 = arith.constant 0 : i32
    %c0_i32_0 = arith.constant 0 : i32
    %c0_i32_1 = arith.constant 0 : i32
    return %arg0, %c0_i32, %c0_i32_0 : i32, i32, i32
  }
}

</mosaic_0001>

<llo_original>
// kernel: tpu_custom_call.1
$region0: #{tpu_custom_call.1}
  #allocation0 [shape = 'u32[]', space=smem, size = 0x4, offset = 0x4, fixed_abs, tag = 'smem constant byte address 0x4 - core index']
  #allocation1 [shape = 'u32[144,128]{1,0:T(1,128)}', space=vmem, size = 0x12000, scoped, tag = 'internal scratch']
  %s0 = inlined_call_operand.vmem [shape: f32[1,22,128], index: 0, kind: input, shape index: {}]
  %s1 = inlined_call_operand.hbm [shape: f32[4,16,128], index: 1, kind: output, shape index: {}]
  %s2 = sld [smem:[#allocation0]]
  $region14: #{tpu_custom_call.1} parent=0
    _
  %s4 = ssub.s32 1, %s2
  %s5 = scalar_select 0, %s4, %s2
  $region1: #{tpu_custom_call.1} parent=0
    #allocation2 [shape = 'u8[32768]{0}', space=vmem, size = 0x8000, scoped, tag = 'output window, operand 0, single buffered']
    #allocation3 [shape = 's32[1]{0}', space=sflag, size = 0x4, scoped, tag = 'scoped memory for tpu_custom_call.1']
    %6 = vsyncpa [#allocation3], 0
    // Predicated region
    $region2: #{tpu_custom_call.1} parent=1 // pred_check
      _
    $region3: #{tpu_custom_call.1} parent=1 // pred_check_branch
      %8 = sbr.rel (0) target = $region5
    $region4: #{tpu_custom_call.1} parent=1 // pred_region
      _
    $region5: #{tpu_custom_call.1} parent=1 // pred_fallthru
      _
    %v9 = vld [vmem:[%s0] sm:$0xff]
    %v10 = vld [vmem:[%s0 + $0x8] sm:$0xff]
    %v11 = vld [vmem:[%s0 + $0x10] sm:$0x3f]
    %v12 = vmul.f32 %v9, %v9
    %v13 = vmul.f32 %v10, %v10
    %v14 = vmul.f32 %v11, %v11
    %15 = vrot.lane.b32.xlu0 %v12, 127
    %v16 = vpop.permute.xlu0 %15
    %17 = vrot.lane.b32.xlu0 %v13, 127
    %v18 = vpop.permute.xlu0 %17
    %19 = vrot.lane.b32.xlu0 %v14, 127
    %v20 = vpop.permute.xlu0 %19
    %v21 = vadd.f32 %v12, %v16
    %v22 = vadd.f32 %v13, %v18
    %v23 = vadd.f32 %v14, %v20
    %24 = vrot.lane.b32.xlu0 %v12, 126
    %v25 = vpop.permute.xlu0 %24
    %26 = vrot.lane.b32.xlu0 %v13, 126
    %v27 = vpop.permute.xlu0 %26
    %28 = vrot.lane.b32.xlu0 %v14, 126
    %v29 = vpop.permute.xlu0 %28
    %v30 = vadd.f32 %v21, %v25
    %v31 = vadd.f32 %v22, %v27
    %v32 = vadd.f32 %v23, %v29
    %33 = vrot.lane.b32.xlu0 %v12, 125
    %v34 = vpop.permute.xlu0 %33
    %35 = vrot.lane.b32.xlu0 %v13, 125
    %v36 = vpop.permute.xlu0 %35
    %37 = vrot.lane.b32.xlu0 %v14, 125
    %v38 = vpop.permute.xlu0 %37
    %v39 = vadd.f32 %v30, %v34
    %v40 = vadd.f32 %v31, %v36
    %v41 = vadd.f32 %v32, %v38
    %42 = vrot.lane.b32.xlu0 %v12, 124
    %v43 = vpop.permute.xlu0 %42
    %44 = vrot.lane.b32.xlu0 %v13, 124
    %v45 = vpop.permute.xlu0 %44
    %46 = vrot.lane.b32.xlu0 %v14, 124
    %v47 = vpop.permute.xlu0 %46
    %v48 = vadd.f32 %v39, %v43
    %v49 = vadd.f32 %v40, %v45
    %v50 = vadd.f32 %v41, %v47
    %51 = vrot.lane.b32.xlu0 %v12, 123
    %v52 = vpop.permute.xlu0 %51
    %53 = vrot.lane.b32.xlu0 %v13, 123
    %v54 = vpop.permute.xlu0 %53
    %55 = vrot.lane.b32.xlu0 %v14, 123
    %v56 = vpop.permute.xlu0 %55
    %v57 = vadd.f32 %v48, %v52
    %v58 = vadd.f32 %v49, %v54
    %v59 = vadd.f32 %v50, %v56
    %60 = vrot.lane.b32.xlu0 %v12, 122
    %v61 = vpop.permute.xlu0 %60
    %62 = vrot.lane.b32.xlu0 %v13, 122
    %v63 = vpop.permute.xlu0 %62
    %64 = vrot.lane.b32.xlu0 %v14, 122
    %v65 = vpop.permute.xlu0 %64
    %v66 = vadd.f32 %v57, %v61
    %v67 = vadd.f32 %v58, %v63
    %v68 = vadd.f32 %v59, %v65
    %vm72 = vcmask 1046528
    %v73 = vrot.slane %v66, 1
    %v74 = vrot.slane %v67, 1
    %v75 = vsel %vm72, %v73, %v74
    %v76 = vrot.slane %v68, 1
    %v77 = vsel %vm72, %v74, %v76
    %v80 = vadd.f32 %v66, %v75
    %v81 = vadd.f32 %v67, %v77
    %vm82 = vcmask 1045504
    %v83 = vrot.slane %v66, 2
    %v84 = vrot.slane %v67, 2
    %v85 = vsel %vm82, %v83, %v84
    %v86 = vrot.slane %v68, 2
    %v87 = vsel %vm82, %v84, %v86
    %v90 = vadd.f32 %v80, %v85
    %v91 = vadd.f32 %v81, %v87
    %vm92 = vcmask 1044480
    %v93 = vrot.slane %v66, 3
    %v94 = vrot.slane %v67, 3
    %v95 = vsel %vm92, %v93, %v94
    %v96 = vrot.slane %v68, 3
    %v97 = vsel %vm92, %v94, %v96
    %v100 = vadd.f32 %v90, %v95
    %v101 = vadd.f32 %v91, %v97
    %vm102 = vcmask 1043456
    %v103 = vrot.slane %v66, 4
    %v104 = vrot.slane %v67, 4
    %v105 = vsel %vm102, %v103, %v104
    %v106 = vrot.slane %v68, 4
    %v107 = vsel %vm102, %v104, %v106
    %v110 = vadd.f32 %v100, %v105
    %v111 = vadd.f32 %v101, %v107
    %vm112 = vcmask 1042432
    %v113 = vrot.slane %v66, 5
    %v114 = vrot.slane %v67, 5
    %v115 = vsel %vm112, %v113, %v114
    %v116 = vrot.slane %v68, 5
    %v117 = vsel %vm112, %v114, %v116
    %v120 = vadd.f32 %v110, %v115
    %v121 = vadd.f32 %v111, %v117
    %vm122 = vcmask 1041408
    %v123 = vrot.slane %v66, 6
    %v124 = vrot.slane %v67, 6
    %v125 = vsel %vm122, %v123, %v124
    %v126 = vrot.slane %v68, 6
    %v127 = vsel %vm122, %v124, %v126
    %v130 = vadd.f32 %v120, %v125
    %v131 = vadd.f32 %v121, %v127
    %v135 = vrot.slane %v9, 1
    %v136 = vrot.slane %v10, 1
    %v137 = vsel %vm72, %v135, %v136
    %v138 = vrot.slane %v11, 1
    %v139 = vsel %vm72, %v136, %v138
    %v142 = vadd.f32 %v9, %v137
    %v143 = vadd.f32 %v10, %v139
    %v144 = vrot.slane %v9, 5
    %v145 = vrot.slane %v10, 5
    %v146 = vsel %vm112, %v144, %v145
    %v147 = vrot.slane %v11, 5
    %v148 = vsel %vm112, %v145, %v147
    %v151 = vadd.f32 %v142, %v146
    %v152 = vadd.f32 %v143, %v148
    %v153 = vrot.slane %v9, 6
    %v154 = vrot.slane %v10, 6
    %v155 = vsel %vm122, %v153, %v154
    %v156 = vrot.slane %v11, 6
    %v157 = vsel %vm122, %v154, %v156
    %v160 = vadd.f32 %v151, %v155
    %v161 = vadd.f32 %v152, %v157
    %162 = vrot.lane.b32.xlu0 %v9, 127
    %v163 = vpop.permute.xlu0 %162
    %164 = vrot.lane.b32.xlu0 %v10, 127
    %v165 = vpop.permute.xlu0 %164
    %166 = vrot.lane.b32.xlu0 %v11, 127
    %v167 = vpop.permute.xlu0 %166
    %v168 = vadd.f32 %v160, %v163
    %v169 = vadd.f32 %v161, %v165
    %v173 = vrot.slane %v163, 6
    %v174 = vrot.slane %v165, 6
    %v175 = vsel %vm122, %v173, %v174
    %v176 = vrot.slane %v167, 6
    %v177 = vsel %vm122, %v174, %v176
    %v180 = vadd.f32 %v168, %v175
    %v181 = vadd.f32 %v169, %v177
    %182 = vrot.lane.b32.xlu0 %v9, 126
    %v183 = vpop.permute.xlu0 %182
    %184 = vrot.lane.b32.xlu0 %v10, 126
    %v185 = vpop.permute.xlu0 %184
    %186 = vrot.lane.b32.xlu0 %v11, 126
    %v187 = vpop.permute.xlu0 %186
    %188 = vrot.lane.b32.xlu0 %v9, 125
    %v189 = vpop.permute.xlu0 %188
    %190 = vrot.lane.b32.xlu0 %v10, 125
    %v191 = vpop.permute.xlu0 %190
    %192 = vrot.lane.b32.xlu0 %v11, 125
    %v193 = vpop.permute.xlu0 %192
    %v194 = vmul.f32 %v189, 0.2846266
    %v195 = vmul.f32 %v191, 0.2846266
    %v196 = vmul.f32 %v193, 0.2846266
    %v197 = vmul.f32 %v189, 0.29380786
    %v198 = vmul.f32 %v191, 0.29380786
    %v199 = vmul.f32 %v193, 0.29380786
    %v203 = vrot.slane %v189, 2
    %v204 = vrot.slane %v191, 2
    %v205 = vsel %vm82, %v203, %v204
    %v206 = vrot.slane %v193, 2
    %v207 = vsel %vm82, %v204, %v206
    %v211 = vadd.f32 %v189, %v205
    %v212 = vadd.f32 %v191, %v207
    %v213 = vadd.f32 %v193, %v206
    %v214 = vrot.slane %v189, 4
    %v215 = vrot.slane %v191, 4
    %v216 = vsel %vm102, %v214, %v215
    %v217 = vrot.slane %v193, 4
    %v218 = vsel %vm102, %v215, %v217
    %v222 = vadd.f32 %v189, %v216
    %v223 = vadd.f32 %v191, %v218
    %v224 = vadd.f32 %v193, %v217
    %v225 = vrot.slane %v189, 6
    %v226 = vrot.slane %v191, 6
    %v227 = vsel %vm122, %v225, %v226
    %v228 = vrot.slane %v193, 6
    %v229 = vsel %vm122, %v226, %v228
    %v232 = vadd.f32 %v189, %v227
    %v233 = vadd.f32 %v191, %v229
    %234 = vrot.lane.b32.xlu0 %v9, 124
    %v235 = vpop.permute.xlu0 %234
    %236 = vrot.lane.b32.xlu0 %v10, 124
    %v237 = vpop.permute.xlu0 %236
    %238 = vrot.lane.b32.xlu0 %v11, 124
    %v239 = vpop.permute.xlu0 %238
    %v242 = vrot.slane %v235, 2
    %v243 = vrot.slane %v237, 2
    %v244 = vsel %vm82, %v242, %v243
    %v248 = vadd.f32 %v183, %v242
    %v249 = vadd.f32 %v185, %v244
    %v250 = vadd.f32 %v187, %v243
    %v252 = vrot.slane %v235, 4
    %v253 = vrot.slane %v237, 4
    %v254 = vsel %vm102, %v252, %v253
    %v255 = vrot.slane %v239, 4
    %v256 = vsel %vm102, %v253, %v255
    %v260 = vadd.f32 %v183, %v252
    %v261 = vadd.f32 %v185, %v254
    %v262 = vadd.f32 %v187, %v256
    %v263 = vrot.slane %v235, 6
    %v264 = vrot.slane %v237, 6
    %v265 = vsel %vm122, %v263, %v264
    %v266 = vrot.slane %v239, 6
    %v267 = vsel %vm122, %v264, %v266
    %v271 = vadd.f32 %v183, %v263
    %v272 = vadd.f32 %v185, %v265
    %v273 = vadd.f32 %v187, %v267
    %v274 = vadd.f32 %v183, %v235
    %v275 = vadd.f32 %v185, %v237
    %v276 = vadd.f32 %v187, %v239
    %v277 = vrot.slane %v239, 2
    %v278 = vsel %vm82, %v243, %v277
    %v281 = vadd.f32 %v183, %v244
    %v282 = vadd.f32 %v185, %v278
    %v283 = vadd.f32 %v187, %v277
    %v285 = vadd.f32 %v183, %v254
    %v286 = vadd.f32 %v185, %v256
    %v287 = vadd.f32 %v187, %v255
    %v288 = vadd.f32 %v183, %v265
    %v289 = vadd.f32 %v185, %v267
    %290 = vrot.lane.b32.xlu0 %v9, 123
    %v291 = vpop.permute.xlu0 %290
    %292 = vrot.lane.b32.xlu0 %v10, 123
    %v293 = vpop.permute.xlu0 %292
    %294 = vrot.lane.b32.xlu0 %v11, 123
    %v295 = vpop.permute.xlu0 %294
    %v296 = vadd.f32 %v180, %v291
    %v297 = vadd.f32 %v181, %v293
    %v301 = vrot.slane %v291, 4
    %v302 = vrot.slane %v293, 4
    %v303 = vsel %vm102, %v301, %v302
    %v304 = vrot.slane %v295, 4
    %v305 = vsel %vm102, %v302, %v304
    %v309 = vadd.f32 %v163, %v301
    %v310 = vadd.f32 %v165, %v303
    %v311 = vadd.f32 %v167, %v305
    %v312 = vrot.slane %v291, 6
    %v313 = vrot.slane %v293, 6
    %v314 = vsel %vm122, %v312, %v313
    %v315 = vrot.slane %v295, 6
    %v316 = vsel %vm122, %v313, %v315
    %v320 = vadd.f32 %v163, %v312
    %v321 = vadd.f32 %v165, %v314
    %v322 = vadd.f32 %v167, %v316
    %v323 = vadd.f32 %v163, %v291
    %v324 = vadd.f32 %v165, %v293
    %v325 = vadd.f32 %v167, %v295
    %v326 = vrot.slane %v291, 2
    %v327 = vrot.slane %v293, 2
    %v328 = vsel %vm82, %v326, %v327
    %v329 = vrot.slane %v295, 2
    %v330 = vsel %vm82, %v327, %v329
    %v334 = vadd.f32 %v163, %v328
    %v335 = vadd.f32 %v165, %v330
    %v336 = vadd.f32 %v167, %v329
    %v338 = vadd.f32 %v163, %v303
    %v339 = vadd.f32 %v165, %v305
    %v340 = vadd.f32 %v167, %v304
    %v341 = vadd.f32 %v296, %v314
    %v342 = vadd.f32 %v297, %v316
    %343 = vrot.lane.b32.xlu0 %v9, 122
    %v344 = vpop.permute.xlu0 %343
    %345 = vrot.lane.b32.xlu0 %v10, 122
    %v346 = vpop.permute.xlu0 %345
    %347 = vrot.lane.b32.xlu0 %v11, 122
    %v348 = vpop.permute.xlu0 %347
    %v349 = vadd.f32 %v341, %v344
    %v350 = vadd.f32 %v342, %v346
    %v354 = vrot.slane %v344, 1
    %v355 = vrot.slane %v346, 1
    %v356 = vsel %vm72, %v354, %v355
    %v357 = vrot.slane %v348, 1
    %v358 = vsel %vm72, %v355, %v357
    %v361 = vadd.f32 %v349, %v356
    %v362 = vadd.f32 %v350, %v358
    %v363 = vrot.slane %v344, 6
    %v364 = vrot.slane %v346, 6
    %v365 = vsel %vm122, %v363, %v364
    %v366 = vrot.slane %v348, 6
    %v367 = vsel %vm122, %v364, %v366
    %v371 = vadd.f32 %v9, %v363
    %v372 = vadd.f32 %v10, %v365
    %v373 = vadd.f32 %v11, %v367
    %v374 = vadd.f32 %v9, %v344
    %v375 = vadd.f32 %v10, %v346
    %v376 = vadd.f32 %v11, %v348
    %v377 = vrot.slane %v344, 2
    %v378 = vrot.slane %v346, 2
    %v379 = vsel %vm82, %v377, %v378
    %v380 = vrot.slane %v348, 2
    %v381 = vsel %vm82, %v378, %v380
    %v385 = vadd.f32 %v9, %v379
    %v386 = vadd.f32 %v10, %v381
    %v387 = vadd.f32 %v11, %v380
    %v388 = vrot.slane %v344, 5
    %v389 = vrot.slane %v346, 5
    %v390 = vsel %vm112, %v388, %v389
    %v391 = vrot.slane %v348, 5
    %v392 = vsel %vm112, %v389, %v391
    %v395 = vadd.f32 %v361, %v390
    %v396 = vadd.f32 %v362, %v392
    %v397 = vadd.f32 %v395, %v365
    %v398 = vadd.f32 %v396, %v367
    %v399 = vmul.f32 %v397, 0.00466845
    %v400 = vmul.f32 %v398, 0.00466845
    %v403 = vrot.slane %v399, 5
    %v404 = vrot.slane %v400, 5
    %v405 = vsel %vm112, %v403, %v404
    %v409 = vadd.f32 %v194, %v403
    %v410 = vadd.f32 %v195, %v405
    %v411 = vadd.f32 %v196, %v404
    %v412 = vmul.f32 %v397, 0.018580211
    %v413 = vmul.f32 %v398, 0.018580211
    %v416 = vrot.slane %v412, 5
    %v417 = vrot.slane %v413, 5
    %v418 = vsel %vm112, %v416, %v417
    %v422 = vadd.f32 %v197, %v416
    %v423 = vadd.f32 %v198, %v418
    %v424 = vadd.f32 %v199, %v417
    %v425 = vmul.f32 %v288, 0.10242672
    %v426 = vmul.f32 %v289, 0.10242672
    %v429 = vrot.slane %v425, 5
    %v430 = vrot.slane %v426, 5
    %v431 = vsel %vm112, %v429, %v430
    %v435 = vadd.f32 %v409, %v429
    %v436 = vadd.f32 %v410, %v431
    %v437 = vadd.f32 %v411, %v430
    %v438 = vmul.f32 %v288, 0.07691826
    %v439 = vmul.f32 %v289, 0.07691826
    %v442 = vrot.slane %v438, 5
    %v443 = vrot.slane %v439, 5
    %v444 = vsel %vm112, %v442, %v443
    %v448 = vadd.f32 %v422, %v442
    %v449 = vadd.f32 %v423, %v444
    %v450 = vadd.f32 %v424, %v443
    %v451 = vmul.f32 %v288, -0.050836507
    %v452 = vmul.f32 %v289, -0.050836507
    %v455 = vrot.slane %v451, 5
    %v456 = vrot.slane %v452, 5
    %v457 = vsel %vm112, %v455, %v456
    %v461 = vadd.f32 %v409, %v455
    %v462 = vadd.f32 %v410, %v457
    %v463 = vadd.f32 %v411, %v456
    %v464 = vmul.f32 %v288, -0.172032
    %v465 = vmul.f32 %v289, -0.172032
    %v468 = vrot.slane %v464, 5
    %v469 = vrot.slane %v465, 5
    %v470 = vsel %vm112, %v468, %v469
    %v474 = vadd.f32 %v422, %v468
    %v475 = vadd.f32 %v423, %v470
    %v476 = vadd.f32 %v424, %v469
    %v477 = vmul.f32 %v232, 0.10298945
    %v478 = vmul.f32 %v233, 0.10298945
    %v481 = vrot.slane %v477, 5
    %v482 = vrot.slane %v478, 5
    %v483 = vsel %vm112, %v481, %v482
    %v487 = vadd.f32 %v435, %v481
    %v488 = vadd.f32 %v436, %v483
    %v489 = vadd.f32 %v437, %v482
    %v490 = vmul.f32 %v232, -0.13962547
    %v491 = vmul.f32 %v233, -0.13962547
    %v494 = vrot.slane %v490, 5
    %v495 = vrot.slane %v491, 5
    %v496 = vsel %vm112, %v494, %v495
    %v500 = vadd.f32 %v448, %v494
    %v501 = vadd.f32 %v449, %v496
    %v502 = vadd.f32 %v450, %v495
    %v503 = vmul.f32 %v232, 0.27053165
    %v504 = vmul.f32 %v233, 0.27053165
    %v507 = vrot.slane %v503, 5
    %v508 = vrot.slane %v504, 5
    %v509 = vsel %vm112, %v507, %v508
    %v513 = vadd.f32 %v461, %v507
    %v514 = vadd.f32 %v462, %v509
    %v515 = vadd.f32 %v463, %v508
    %v516 = vadd.f32 %v474, %v494
    %v517 = vadd.f32 %v475, %v496
    %v518 = vadd.f32 %v476, %v495
    %v519 = vmul.f32 %v248, 0.10242672
    %v520 = vmul.f32 %v249, 0.10242672
    %v521 = vmul.f32 %v250, 0.10242672
    %v525 = vrot.slane %v519, 3
    %v526 = vrot.slane %v520, 3
    %v527 = vsel %vm92, %v525, %v526
    %v528 = vrot.slane %v521, 3
    %v529 = vsel %vm92, %v526, %v528
    %v533 = vadd.f32 %v487, %v527
    %v534 = vadd.f32 %v488, %v529
    %v535 = vadd.f32 %v489, %v528
    %v536 = vmul.f32 %v248, -0.172032
    %v537 = vmul.f32 %v249, -0.172032
    %v538 = vmul.f32 %v250, -0.172032
    %v542 = vrot.slane %v536, 3
    %v543 = vrot.slane %v537, 3
    %v544 = vsel %vm92, %v542, %v543
    %v545 = vrot.slane %v538, 3
    %v546 = vsel %vm92, %v543, %v545
    %v550 = vadd.f32 %v500, %v544
    %v551 = vadd.f32 %v501, %v546
    %v552 = vadd.f32 %v502, %v545
    %v553 = vmul.f32 %v248, -0.050836507
    %v554 = vmul.f32 %v249, -0.050836507
    %v555 = vmul.f32 %v250, -0.050836507
    %v559 = vrot.slane %v553, 3
    %v560 = vrot.slane %v554, 3
    %v561 = vsel %vm92, %v559, %v560
    %v562 = vrot.slane %v555, 3
    %v563 = vsel %vm92, %v560, %v562
    %v567 = vadd.f32 %v513, %v561
    %v568 = vadd.f32 %v514, %v563
    %v569 = vadd.f32 %v515, %v562
    %v570 = vmul.f32 %v248, 0.07691826
    %v571 = vmul.f32 %v249, 0.07691826
    %v572 = vmul.f32 %v250, 0.07691826
    %v576 = vrot.slane %v570, 3
    %v577 = vrot.slane %v571, 3
    %v578 = vsel %vm92, %v576, %v577
    %v579 = vrot.slane %v572, 3
    %v580 = vsel %vm92, %v577, %v579
    %v584 = vadd.f32 %v516, %v578
    %v585 = vadd.f32 %v517, %v580
    %v586 = vadd.f32 %v518, %v579
    %v587 = vmul.f32 %v338, -0.18633553
    %v588 = vmul.f32 %v339, -0.18633553
    %v589 = vmul.f32 %v340, -0.18633553
    %v593 = vrot.slane %v587, 6
    %v594 = vrot.slane %v588, 6
    %v595 = vsel %vm122, %v593, %v594
    %v596 = vrot.slane %v589, 6
    %v597 = vsel %vm122, %v594, %v596
    %v601 = vadd.f32 %v533, %v593
    %v602 = vadd.f32 %v534, %v595
    %v603 = vadd.f32 %v535, %v597
    %v604 = vmul.f32 %v338, 0.077591814
    %v605 = vmul.f32 %v339, 0.077591814
    %v606 = vmul.f32 %v340, 0.077591814
    %v610 = vrot.slane %v604, 6
    %v611 = vrot.slane %v605, 6
    %v612 = vsel %vm122, %v610, %v611
    %v613 = vrot.slane %v606, 6
    %v614 = vsel %vm122, %v611, %v613
    %v618 = vadd.f32 %v550, %v610
    %v619 = vadd.f32 %v551, %v612
    %v620 = vadd.f32 %v552, %v614
    %v621 = vadd.f32 %v567, %v593
    %v622 = vadd.f32 %v568, %v595
    %v623 = vadd.f32 %v569, %v597
    %v624 = vmul.f32 %v338, 0.28145564
    %v625 = vmul.f32 %v339, 0.28145564
    %v626 = vmul.f32 %v340, 0.28145564
    %v630 = vrot.slane %v624, 6
    %v631 = vrot.slane %v625, 6
    %v632 = vsel %vm122, %v630, %v631
    %v633 = vrot.slane %v626, 6
    %v634 = vsel %vm122, %v631, %v633
    %v638 = vadd.f32 %v584, %v630
    %v639 = vadd.f32 %v585, %v632
    %v640 = vadd.f32 %v586, %v634
    %v641 = vmul.f32 %v285, -0.18965298
    %v642 = vmul.f32 %v286, -0.18965298
    %v643 = vmul.f32 %v287, -0.18965298
    %v647 = vrot.slane %v641, 6
    %v648 = vrot.slane %v642, 6
    %v649 = vsel %vm122, %v647, %v648
    %v650 = vrot.slane %v643, 6
    %v651 = vsel %vm122, %v648, %v650
    %v655 = vadd.f32 %v601, %v647
    %v656 = vadd.f32 %v602, %v649
    %v657 = vadd.f32 %v603, %v651
    %v658 = vmul.f32 %v285, -0.14329976
    %v659 = vmul.f32 %v286, -0.14329976
    %v660 = vmul.f32 %v287, -0.14329976
    %v664 = vrot.slane %v658, 6
    %v665 = vrot.slane %v659, 6
    %v666 = vsel %vm122, %v664, %v665
    %v667 = vrot.slane %v660, 6
    %v668 = vsel %vm122, %v665, %v667
    %v672 = vadd.f32 %v618, %v664
    %v673 = vadd.f32 %v619, %v666
    %v674 = vadd.f32 %v620, %v668
    %v675 = vmul.f32 %v285, -0.05245252
    %v676 = vmul.f32 %v286, -0.05245252
    %v677 = vmul.f32 %v287, -0.05245252
    %v681 = vrot.slane %v675, 6
    %v682 = vrot.slane %v676, 6
    %v683 = vsel %vm122, %v681, %v682
    %v684 = vrot.slane %v677, 6
    %v685 = vsel %vm122, %v682, %v684
    %v689 = vadd.f32 %v621, %v681
    %v690 = vadd.f32 %v622, %v683
    %v691 = vadd.f32 %v623, %v685
    %v692 = vmul.f32 %v285, 0.09570172
    %v693 = vmul.f32 %v286, 0.09570172
    %v694 = vmul.f32 %v287, 0.09570172
    %v698 = vrot.slane %v692, 6
    %v699 = vrot.slane %v693, 6
    %v700 = vsel %vm122, %v698, %v699
    %v701 = vrot.slane %v694, 6
    %v702 = vsel %vm122, %v699, %v701
    %v706 = vadd.f32 %v638, %v698
    %v707 = vadd.f32 %v639, %v700
    %v708 = vadd.f32 %v640, %v702
    %v709 = vmul.f32 %v222, -0.19077156
    %v710 = vmul.f32 %v223, -0.19077156
    %v711 = vmul.f32 %v224, -0.19077156
    %v715 = vrot.slane %v709, 6
    %v716 = vrot.slane %v710, 6
    %v717 = vsel %vm122, %v715, %v716
    %v718 = vrot.slane %v711, 6
    %v719 = vsel %vm122, %v716, %v718
    %v723 = vadd.f32 %v655, %v715
    %v724 = vadd.f32 %v656, %v717
    %v725 = vadd.f32 %v657, %v719
    %v726 = vmul.f32 %v222, -0.17871079
    %v727 = vmul.f32 %v223, -0.17871079
    %v728 = vmul.f32 %v224, -0.17871079
    %v732 = vrot.slane %v726, 6
    %v733 = vrot.slane %v727, 6
    %v734 = vsel %vm122, %v732, %v733
    %v735 = vrot.slane %v728, 6
    %v736 = vsel %vm122, %v733, %v735
    %v740 = vadd.f32 %v672, %v732
    %v741 = vadd.f32 %v673, %v734
    %v742 = vadd.f32 %v674, %v736
    %v743 = vmul.f32 %v222, 0.2782722
    %v744 = vmul.f32 %v223, 0.2782722
    %v745 = vmul.f32 %v224, 0.2782722
    %v749 = vrot.slane %v743, 6
    %v750 = vrot.slane %v744, 6
    %v751 = vsel %vm122, %v749, %v750
    %v752 = vrot.slane %v745, 6
    %v753 = vsel %vm122, %v750, %v752
    %v757 = vadd.f32 %v689, %v749
    %v758 = vadd.f32 %v690, %v751
    %v759 = vadd.f32 %v691, %v753
    %v760 = vadd.f32 %v706, %v732
    %v761 = vadd.f32 %v707, %v734
    %v762 = vadd.f32 %v708, %v736
    %v763 = vmul.f32 %v260, -0.18965298
    %v764 = vmul.f32 %v261, -0.18965298
    %v765 = vmul.f32 %v262, -0.18965298
    %v769 = vrot.slane %v763, 2
    %v770 = vrot.slane %v764, 2
    %v771 = vsel %vm82, %v769, %v770
    %v772 = vrot.slane %v765, 2
    %v773 = vsel %vm82, %v770, %v772
    %v777 = vadd.f32 %v723, %v771
    %v778 = vadd.f32 %v724, %v773
    %v779 = vadd.f32 %v725, %v772
    %v780 = vmul.f32 %v260, 0.09570172
    %v781 = vmul.f32 %v261, 0.09570172
    %v782 = vmul.f32 %v262, 0.09570172
    %v786 = vrot.slane %v780, 2
    %v787 = vrot.slane %v781, 2
    %v788 = vsel %vm82, %v786, %v787
    %v789 = vrot.slane %v782, 2
    %v790 = vsel %vm82, %v787, %v789
    %v794 = vadd.f32 %v740, %v788
    %v795 = vadd.f32 %v741, %v790
    %v796 = vadd.f32 %v742, %v789
    %v797 = vmul.f32 %v260, -0.05245252
    %v798 = vmul.f32 %v261, -0.05245252
    %v799 = vmul.f32 %v262, -0.05245252
    %v803 = vrot.slane %v797, 2
    %v804 = vrot.slane %v798, 2
    %v805 = vsel %vm82, %v803, %v804
    %v806 = vrot.slane %v799, 2
    %v807 = vsel %vm82, %v804, %v806
    %v811 = vadd.f32 %v757, %v805
    %v812 = vadd.f32 %v758, %v807
    %v813 = vadd.f32 %v759, %v806
    %v814 = vmul.f32 %v260, -0.14329976
    %v815 = vmul.f32 %v261, -0.14329976
    %v816 = vmul.f32 %v262, -0.14329976
    %v820 = vrot.slane %v814, 2
    %v821 = vrot.slane %v815, 2
    %v822 = vsel %vm82, %v820, %v821
    %v823 = vrot.slane %v816, 2
    %v824 = vsel %vm82, %v821, %v823
    %v828 = vadd.f32 %v760, %v822
    %v829 = vadd.f32 %v761, %v824
    %v830 = vadd.f32 %v762, %v823
    %v831 = vmul.f32 %v309, -0.18633553
    %v832 = vmul.f32 %v310, -0.18633553
    %v833 = vmul.f32 %v311, -0.18633553
    %v837 = vrot.slane %v831, 2
    %v838 = vrot.slane %v832, 2
    %v839 = vsel %vm82, %v837, %v838
    %v840 = vrot.slane %v833, 2
    %v841 = vsel %vm82, %v838, %v840
    %v845 = vadd.f32 %v777, %v839
    %v846 = vadd.f32 %v778, %v841
    %v847 = vadd.f32 %v779, %v840
    %v848 = vmul.f32 %v309, 0.28145564
    %v849 = vmul.f32 %v310, 0.28145564
    %v850 = vmul.f32 %v311, 0.28145564
    %v854 = vrot.slane %v848, 2
    %v855 = vrot.slane %v849, 2
    %v856 = vsel %vm82, %v854, %v855
    %v857 = vrot.slane %v850, 2
    %v858 = vsel %vm82, %v855, %v857
    %v862 = vadd.f32 %v794, %v856
    %v863 = vadd.f32 %v795, %v858
    %v864 = vadd.f32 %v796, %v857
    %v865 = vadd.f32 %v811, %v839
    %v866 = vadd.f32 %v812, %v841
    %v867 = vadd.f32 %v813, %v840
    %v868 = vmul.f32 %v309, 0.077591814
    %v869 = vmul.f32 %v310, 0.077591814
    %v870 = vmul.f32 %v311, 0.077591814
    %v874 = vrot.slane %v868, 2
    %v875 = vrot.slane %v869, 2
    %v876 = vsel %vm82, %v874, %v875
    %v877 = vrot.slane %v870, 2
    %v878 = vsel %vm82, %v875, %v877
    %v882 = vadd.f32 %v828, %v876
    %v883 = vadd.f32 %v829, %v878
    %v884 = vadd.f32 %v830, %v877
    %v885 = vmul.f32 %v385, -0.050836507
    %v886 = vmul.f32 %v386, -0.050836507
    %v887 = vmul.f32 %v387, -0.050836507
    %vm891 = vcmask 1040384
    %v892 = vrot.slane %v885, 7
    %v893 = vrot.slane %v886, 7
    %v894 = vsel %vm891, %v892, %v893
    %v895 = vrot.slane %v887, 7
    %v896 = vsel %vm891, %v893, %v895
    %v900 = vadd.f32 %v845, %v892
    %v901 = vadd.f32 %v846, %v894
    %v902 = vadd.f32 %v847, %v896
    %v903 = vmul.f32 %v385, 0.07691826
    %v904 = vmul.f32 %v386, 0.07691826
    %v905 = vmul.f32 %v387, 0.07691826
    %v909 = vrot.slane %v903, 7
    %v910 = vrot.slane %v904, 7
    %v911 = vsel %vm891, %v909, %v910
    %v912 = vrot.slane %v905, 7
    %v913 = vsel %vm891, %v910, %v912
    %v917 = vadd.f32 %v862, %v909
    %v918 = vadd.f32 %v863, %v911
    %v919 = vadd.f32 %v864, %v913
    %v920 = vmul.f32 %v385, 0.10242672
    %v921 = vmul.f32 %v386, 0.10242672
    %v922 = vmul.f32 %v387, 0.10242672
    %v926 = vrot.slane %v920, 7
    %v927 = vrot.slane %v921, 7
    %v928 = vsel %vm891, %v926, %v927
    %v929 = vrot.slane %v922, 7
    %v930 = vsel %vm891, %v927, %v929
    %v934 = vadd.f32 %v865, %v926
    %v935 = vadd.f32 %v866, %v928
    %v936 = vadd.f32 %v867, %v930
    %v937 = vmul.f32 %v385, -0.172032
    %v938 = vmul.f32 %v386, -0.172032
    %v939 = vmul.f32 %v387, -0.172032
    %v943 = vrot.slane %v937, 7
    %v944 = vrot.slane %v938, 7
    %v945 = vsel %vm891, %v943, %v944
    %v946 = vrot.slane %v939, 7
    %v947 = vsel %vm891, %v944, %v946
    %v951 = vadd.f32 %v882, %v943
    %v952 = vadd.f32 %v883, %v945
    %v953 = vadd.f32 %v884, %v947
    %v954 = vmul.f32 %v334, -0.05245252
    %v955 = vmul.f32 %v335, -0.05245252
    %v956 = vmul.f32 %v336, -0.05245252
    %v960 = vrot.slane %v954, 7
    %v961 = vrot.slane %v955, 7
    %v962 = vsel %vm891, %v960, %v961
    %v963 = vrot.slane %v956, 7
    %v964 = vsel %vm891, %v961, %v963
    %v968 = vadd.f32 %v900, %v960
    %v969 = vadd.f32 %v901, %v962
    %v970 = vadd.f32 %v902, %v964
    %v971 = vmul.f32 %v334, -0.14329976
    %v972 = vmul.f32 %v335, -0.14329976
    %v973 = vmul.f32 %v336, -0.14329976
    %v977 = vrot.slane %v971, 7
    %v978 = vrot.slane %v972, 7
    %v979 = vsel %vm891, %v977, %v978
    %v980 = vrot.slane %v973, 7
    %v981 = vsel %vm891, %v978, %v980
    %v985 = vadd.f32 %v917, %v977
    %v986 = vadd.f32 %v918, %v979
    %v987 = vadd.f32 %v919, %v981
    %v988 = vmul.f32 %v334, -0.18965298
    %v989 = vmul.f32 %v335, -0.18965298
    %v990 = vmul.f32 %v336, -0.18965298
    %v994 = vrot.slane %v988, 7
    %v995 = vrot.slane %v989, 7
    %v996 = vsel %vm891, %v994, %v995
    %v997 = vrot.slane %v990, 7
    %v998 = vsel %vm891, %v995, %v997
    %v1002 = vadd.f32 %v934, %v994
    %v1003 = vadd.f32 %v935, %v996
    %v1004 = vadd.f32 %v936, %v998
    %v1005 = vmul.f32 %v334, 0.09570172
    %v1006 = vmul.f32 %v335, 0.09570172
    %v1007 = vmul.f32 %v336, 0.09570172
    %v1011 = vrot.slane %v1005, 7
    %v1012 = vrot.slane %v1006, 7
    %v1013 = vsel %vm891, %v1011, %v1012
    %v1014 = vrot.slane %v1007, 7
    %v1015 = vsel %vm891, %v1012, %v1014
    %v1019 = vadd.f32 %v951, %v1011
    %v1020 = vadd.f32 %v952, %v1013
    %v1021 = vadd.f32 %v953, %v1015
    %v1022 = vmul.f32 %v281, -0.053444624
    %v1023 = vmul.f32 %v282, -0.053444624
    %v1024 = vmul.f32 %v283, -0.053444624
    %v1028 = vrot.slane %v1022, 7
    %v1029 = vrot.slane %v1023, 7
    %v1030 = vsel %vm891, %v1028, %v1029
    %v1031 = vrot.slane %v1024, 7
    %v1032 = vsel %vm891, %v1029, %v1031
    %v1036 = vadd.f32 %v968, %v1028
    %v1037 = vadd.f32 %v969, %v1030
    %v1038 = vadd.f32 %v970, %v1032
    %v1039 = vmul.f32 %v281, -0.18098867
    %v1040 = vmul.f32 %v282, -0.18098867
    %v1041 = vmul.f32 %v283, -0.18098867
    %v1045 = vrot.slane %v1039, 7
    %v1046 = vrot.slane %v1040, 7
    %v1047 = vsel %vm891, %v1045, %v1046
    %v1048 = vrot.slane %v1041, 7
    %v1049 = vsel %vm891, %v1046, %v1048
    %v1053 = vadd.f32 %v985, %v1045
    %v1054 = vadd.f32 %v986, %v1047
    %v1055 = vadd.f32 %v987, %v1049
    %v1056 = vadd.f32 %v1002, %v1028
    %v1057 = vadd.f32 %v1003, %v1030
    %v1058 = vadd.f32 %v1004, %v1032
    %v1059 = vmul.f32 %v281, 0.29066643
    %v1060 = vmul.f32 %v282, 0.29066643
    %v1061 = vmul.f32 %v283, 0.29066643
    %v1065 = vrot.slane %v1059, 7
    %v1066 = vrot.slane %v1060, 7
    %v1067 = vsel %vm891, %v1065, %v1066
    %v1068 = vrot.slane %v1061, 7
    %v1069 = vsel %vm891, %v1066, %v1068
    %v1073 = vadd.f32 %v1019, %v1065
    %v1074 = vadd.f32 %v1020, %v1067
    %v1075 = vadd.f32 %v1021, %v1069
    %v1076 = vmul.f32 %v211, -0.05377914
    %v1077 = vmul.f32 %v212, -0.05377914
    %v1078 = vmul.f32 %v213, -0.05377914
    %v1082 = vrot.slane %v1076, 7
    %v1083 = vrot.slane %v1077, 7
    %v1084 = vsel %vm891, %v1082, %v1083
    %v1085 = vrot.slane %v1078, 7
    %v1086 = vsel %vm891, %v1083, %v1085
    %v1090 = vadd.f32 %v1036, %v1082
    %v1091 = vadd.f32 %v1037, %v1084
    %v1092 = vadd.f32 %v1038, %v1086
    %v1093 = vmul.f32 %v211, 0.09749285
    %v1094 = vmul.f32 %v212, 0.09749285
    %v1095 = vmul.f32 %v213, 0.09749285
    %v1099 = vrot.slane %v1093, 7
    %v1100 = vrot.slane %v1094, 7
    %v1101 = vsel %vm891, %v1099, %v1100
    %v1102 = vrot.slane %v1095, 7
    %v1103 = vsel %vm891, %v1100, %v1102
    %v1107 = vadd.f32 %v1053, %v1099
    %v1108 = vadd.f32 %v1054, %v1101
    %v1109 = vadd.f32 %v1055, %v1103
    %v1110 = vmul.f32 %v211, 0.28302428
    %v1111 = vmul.f32 %v212, 0.28302428
    %v1112 = vmul.f32 %v213, 0.28302428
    %v1116 = vrot.slane %v1110, 7
    %v1117 = vrot.slane %v1111, 7
    %v1118 = vsel %vm891, %v1116, %v1117
    %v1119 = vrot.slane %v1112, 7
    %v1120 = vsel %vm891, %v1117, %v1119
    %v1124 = vadd.f32 %v1056, %v1116
    %v1125 = vadd.f32 %v1057, %v1118
    %v1126 = vadd.f32 %v1058, %v1120
    %v1127 = vadd.f32 %v1073, %v1099
    %v1128 = vadd.f32 %v1074, %v1101
    %v1129 = vadd.f32 %v1075, %v1103
    %v1130 = vmul.f32 %v271, -0.053444624
    %v1131 = vmul.f32 %v272, -0.053444624
    %v1132 = vmul.f32 %v273, -0.053444624
    %v1136 = vrot.slane %v1130, 1
    %v1137 = vrot.slane %v1131, 1
    %v1138 = vsel %vm72, %v1136, %v1137
    %v1139 = vrot.slane %v1132, 1
    %v1140 = vsel %vm72, %v1137, %v1139
    %v1144 = vadd.f32 %v1090, %v1138
    %v1145 = vadd.f32 %v1091, %v1140
    %v1146 = vadd.f32 %v1092, %v1139
    %v1147 = vmul.f32 %v271, 0.29066643
    %v1148 = vmul.f32 %v272, 0.29066643
    %v1149 = vmul.f32 %v273, 0.29066643
    %v1153 = vrot.slane %v1147, 1
    %v1154 = vrot.slane %v1148, 1
    %v1155 = vsel %vm72, %v1153, %v1154
    %v1156 = vrot.slane %v1149, 1
    %v1157 = vsel %vm72, %v1154, %v1156
    %v1161 = vadd.f32 %v1107, %v1155
    %v1162 = vadd.f32 %v1108, %v1157
    %v1163 = vadd.f32 %v1109, %v1156
    %v1164 = vadd.f32 %v1124, %v1138
    %v1165 = vadd.f32 %v1125, %v1140
    %v1166 = vadd.f32 %v1126, %v1139
    %v1167 = vmul.f32 %v271, -0.18098867
    %v1168 = vmul.f32 %v272, -0.18098867
    %v1169 = vmul.f32 %v273, -0.18098867
    %v1173 = vrot.slane %v1167, 1
    %v1174 = vrot.slane %v1168, 1
    %v1175 = vsel %vm72, %v1173, %v1174
    %v1176 = vrot.slane %v1169, 1
    %v1177 = vsel %vm72, %v1174, %v1176
    %v1181 = vadd.f32 %v1127, %v1175
    %v1182 = vadd.f32 %v1128, %v1177
    %v1183 = vadd.f32 %v1129, %v1176
    %v1184 = vmul.f32 %v320, -0.05245252
    %v1185 = vmul.f32 %v321, -0.05245252
    %v1186 = vmul.f32 %v322, -0.05245252
    %v1190 = vrot.slane %v1184, 1
    %v1191 = vrot.slane %v1185, 1
    %v1192 = vsel %vm72, %v1190, %v1191
    %v1193 = vrot.slane %v1186, 1
    %v1194 = vsel %vm72, %v1191, %v1193
    %v1198 = vadd.f32 %v1144, %v1192
    %v1199 = vadd.f32 %v1145, %v1194
    %v1200 = vadd.f32 %v1146, %v1193
    %v1201 = vmul.f32 %v320, 0.09570172
    %v1202 = vmul.f32 %v321, 0.09570172
    %v1203 = vmul.f32 %v322, 0.09570172
    %v1207 = vrot.slane %v1201, 1
    %v1208 = vrot.slane %v1202, 1
    %v1209 = vsel %vm72, %v1207, %v1208
    %v1210 = vrot.slane %v1203, 1
    %v1211 = vsel %vm72, %v1208, %v1210
    %v1215 = vadd.f32 %v1161, %v1209
    %v1216 = vadd.f32 %v1162, %v1211
    %v1217 = vadd.f32 %v1163, %v1210
    %v1218 = vmul.f32 %v320, -0.18965298
    %v1219 = vmul.f32 %v321, -0.18965298
    %v1220 = vmul.f32 %v322, -0.18965298
    %v1224 = vrot.slane %v1218, 1
    %v1225 = vrot.slane %v1219, 1
    %v1226 = vsel %vm72, %v1224, %v1225
    %v1227 = vrot.slane %v1220, 1
    %v1228 = vsel %vm72, %v1225, %v1227
    %v1232 = vadd.f32 %v1164, %v1226
    %v1233 = vadd.f32 %v1165, %v1228
    %v1234 = vadd.f32 %v1166, %v1227
    %v1235 = vmul.f32 %v320, -0.14329976
    %v1236 = vmul.f32 %v321, -0.14329976
    %v1237 = vmul.f32 %v322, -0.14329976
    %v1241 = vrot.slane %v1235, 1
    %v1242 = vrot.slane %v1236, 1
    %v1243 = vsel %vm72, %v1241, %v1242
    %v1244 = vrot.slane %v1237, 1
    %v1245 = vsel %vm72, %v1242, %v1244
    %v1249 = vadd.f32 %v1181, %v1243
    %v1250 = vadd.f32 %v1182, %v1245
    %v1251 = vadd.f32 %v1183, %v1244
    %v1252 = vmul.f32 %v371, -0.050836507
    %v1253 = vmul.f32 %v372, -0.050836507
    %v1254 = vmul.f32 %v373, -0.050836507
    %v1258 = vrot.slane %v1252, 1
    %v1259 = vrot.slane %v1253, 1
    %v1260 = vsel %vm72, %v1258, %v1259
    %v1261 = vrot.slane %v1254, 1
    %v1262 = vsel %vm72, %v1259, %v1261
    %v1266 = vadd.f32 %v1198, %v1260
    %v1267 = vadd.f32 %v1199, %v1262
    %v1268 = vadd.f32 %v1200, %v1261
    %v1269 = vmul.f32 %v371, -0.172032
    %v1270 = vmul.f32 %v372, -0.172032
    %v1271 = vmul.f32 %v373, -0.172032
    %v1275 = vrot.slane %v1269, 1
    %v1276 = vrot.slane %v1270, 1
    %v1277 = vsel %vm72, %v1275, %v1276
    %v1278 = vrot.slane %v1271, 1
    %v1279 = vsel %vm72, %v1276, %v1278
    %v1283 = vadd.f32 %v1215, %v1277
    %v1284 = vadd.f32 %v1216, %v1279
    %v1285 = vadd.f32 %v1217, %v1278
    %v1286 = vmul.f32 %v371, 0.10242672
    %v1287 = vmul.f32 %v372, 0.10242672
    %v1288 = vmul.f32 %v373, 0.10242672
    %v1292 = vrot.slane %v1286, 1
    %v1293 = vrot.slane %v1287, 1
    %v1294 = vsel %vm72, %v1292, %v1293
    %v1295 = vrot.slane %v1288, 1
    %v1296 = vsel %vm72, %v1293, %v1295
    %v1300 = vadd.f32 %v1232, %v1294
    %v1301 = vadd.f32 %v1233, %v1296
    %v1302 = vadd.f32 %v1234, %v1295
    %v1303 = vmul.f32 %v371, 0.07691826
    %v1304 = vmul.f32 %v372, 0.07691826
    %v1305 = vmul.f32 %v373, 0.07691826
    %v1309 = vrot.slane %v1303, 1
    %v1310 = vrot.slane %v1304, 1
    %v1311 = vsel %vm72, %v1309, %v1310
    %v1312 = vrot.slane %v1305, 1
    %v1313 = vsel %vm72, %v1310, %v1312
    %v1317 = vadd.f32 %v1249, %v1311
    %v1318 = vadd.f32 %v1250, %v1313
    %v1319 = vadd.f32 %v1251, %v1312
    %v1320 = vmul.f32 %v374, 0.27053165
    %v1321 = vmul.f32 %v375, 0.27053165
    %v1322 = vmul.f32 %v376, 0.27053165
    %v1323 = vadd.f32 %v1266, %v1320
    %v1324 = vadd.f32 %v1267, %v1321
    %v1325 = vadd.f32 %v1268, %v1322
    %v1326 = vmul.f32 %v374, -0.13962547
    %v1327 = vmul.f32 %v375, -0.13962547
    %v1328 = vmul.f32 %v376, -0.13962547
    %v1329 = vadd.f32 %v1283, %v1326
    %v1330 = vadd.f32 %v1284, %v1327
    %v1331 = vadd.f32 %v1285, %v1328
    %v1332 = vmul.f32 %v374, 0.10298945
    %v1333 = vmul.f32 %v375, 0.10298945
    %v1334 = vmul.f32 %v376, 0.10298945
    %v1335 = vadd.f32 %v1300, %v1332
    %v1336 = vadd.f32 %v1301, %v1333
    %v1337 = vadd.f32 %v1302, %v1334
    %v1338 = vadd.f32 %v1317, %v1326
    %v1339 = vadd.f32 %v1318, %v1327
    %v1340 = vadd.f32 %v1319, %v1328
    %v1341 = vmul.f32 %v323, 0.2782722
    %v1342 = vmul.f32 %v324, 0.2782722
    %v1343 = vmul.f32 %v325, 0.2782722
    %v1344 = vadd.f32 %v1323, %v1341
    %v1345 = vadd.f32 %v1324, %v1342
    %v1346 = vadd.f32 %v1325, %v1343
    %v1347 = vmul.f32 %v323, -0.17871079
    %v1348 = vmul.f32 %v324, -0.17871079
    %v1349 = vmul.f32 %v325, -0.17871079
    %v1350 = vadd.f32 %v1329, %v1347
    %v1351 = vadd.f32 %v1330, %v1348
    %v1352 = vadd.f32 %v1331, %v1349
    %v1353 = vmul.f32 %v323, -0.19077156
    %v1354 = vmul.f32 %v324, -0.19077156
    %v1355 = vmul.f32 %v325, -0.19077156
    %v1356 = vadd.f32 %v1335, %v1353
    %v1357 = vadd.f32 %v1336, %v1354
    %v1358 = vadd.f32 %v1337, %v1355
    %v1359 = vadd.f32 %v1338, %v1347
    %v1360 = vadd.f32 %v1339, %v1348
    %v1361 = vadd.f32 %v1340, %v1349
    %v1362 = vmul.f32 %v274, 0.28302428
    %v1363 = vmul.f32 %v275, 0.28302428
    %v1364 = vmul.f32 %v276, 0.28302428
    %v1365 = vadd.f32 %v1344, %v1362
    %v1366 = vadd.f32 %v1345, %v1363
    %v1367 = vadd.f32 %v1346, %v1364
    %v1368 = vmul.f32 %v274, 0.09749285
    %v1369 = vmul.f32 %v275, 0.09749285
    %v1370 = vmul.f32 %v276, 0.09749285
    %v1371 = vadd.f32 %v1350, %v1368
    %v1372 = vadd.f32 %v1351, %v1369
    %v1373 = vadd.f32 %v1352, %v1370
    %v1374 = vmul.f32 %v274, -0.05377914
    %v1375 = vmul.f32 %v275, -0.05377914
    %v1376 = vmul.f32 %v276, -0.05377914
    %v1377 = vadd.f32 %v1356, %v1374
    %v1378 = vadd.f32 %v1357, %v1375
    %v1379 = vadd.f32 %v1358, %v1376
    %v1380 = vadd.f32 %v1359, %v1368
    %v1381 = vadd.f32 %v1360, %v1369
    %v1382 = vadd.f32 %v1361, %v1370
    %vm1383 = vcmp.eq.f32.partialorder %v130, 0.0
    %vm1384 = vcmp.eq.f32.partialorder %v131, 0.0
    %v1385 = vsel %vm1383, 1.0, %v130
    %v1386 = vsel %vm1384, 1.0, %v131
    %v1387 = vrsqrt.pop %v1385
    %v1388 = vrsqrt.pop %v1386
    %v1389 = vand.u32 2147483647, %v1365
    %v1390 = vand.u32 2147483647, %v1366
    %v1391 = vand.u32 2147483647, %v1367
    %v1394 = vrot.slane %v1387, 5
    %v1395 = vrot.slane %v1388, 5
    %v1396 = vsel %vm112, %v1394, %v1395
    %v1400 = vmul.f32 %v1389, %v1394
    %v1401 = vmul.f32 %v1390, %v1396
    %v1402 = vmul.f32 %v1391, %v1395
    %1403 = vst [vmem:[#allocation2 - $0x3] sm:$0xf8] %v1400
    %1404 = vst [vmem:[#allocation2 + $0x5] sm:$0xff] %v1401
    %1405 = vst [vmem:[#allocation2 + $0xd] sm:$0x7] %v1402
    %v1406 = vand.u32 2147483647, %v1371
    %v1407 = vand.u32 2147483647, %v1372
    %v1408 = vand.u32 2147483647, %v1373
    %v1409 = vmul.f32 %v1406, %v1394
    %v1410 = vmul.f32 %v1407, %v1396
    %v1411 = vmul.f32 %v1408, %v1395
    %s1412 = scalar_lea.vmem [#allocation2], 16
    %1413 = vst [vmem:[%s1412 - $0x3] sm:$0xf8] %v1409
    %1414 = vst [vmem:[%s1412 + $0x5] sm:$0xff] %v1410
    %1415 = vst [vmem:[%s1412 + $0xd] sm:$0x7] %v1411
    %v1416 = vand.u32 2147483647, %v1377
    %v1417 = vand.u32 2147483647, %v1378
    %v1418 = vand.u32 2147483647, %v1379
    %v1419 = vmul.f32 %v1416, %v1394
    %v1420 = vmul.f32 %v1417, %v1396
    %v1421 = vmul.f32 %v1418, %v1395
    %s1422 = scalar_lea.vmem [#allocation2], 32
    %1423 = vst [vmem:[%s1422 - $0x3] sm:$0xf8] %v1419
    %1424 = vst [vmem:[%s1422 + $0x5] sm:$0xff] %v1420
    %1425 = vst [vmem:[%s1422 + $0xd] sm:$0x7] %v1421
    %v1426 = vand.u32 2147483647, %v1380
    %v1427 = vand.u32 2147483647, %v1381
    %v1428 = vand.u32 2147483647, %v1382
    %v1429 = vmul.f32 %v1426, %v1394
    %v1430 = vmul.f32 %v1427, %v1396
    %v1431 = vmul.f32 %v1428, %v1395
    %s1432 = scalar_lea.vmem [#allocation2], 48
    %1433 = vst [vmem:[%s1432 - $0x3] sm:$0xf8] %v1429
    %1434 = vst [vmem:[%s1432 + $0x5] sm:$0xff] %v1430
    %1435 = vst [vmem:[%s1432 + $0xd] sm:$0x7] %v1431
    // Predicated region
    $region6: #{tpu_custom_call.1} parent=1 // pred_check
      _
    $region7: #{tpu_custom_call.1} parent=1 // pred_check_branch
      %1437 = sbr.rel (0) target = $region9
    $region8: #{tpu_custom_call.1} parent=1 // pred_region
      %s1439 = ssub.s32 1024, 1024
      %1440 = vsyncadd [#allocation3], %s1439
      %s1441 = sshll.u32 [#allocation2], 4
      %s1442 = int_to_ptr.vmem [resolvable:$true] %s1441
      %1447 = dma.vmem_to_hbm [thread:$0]  %s1442, 1024, %s1, [#allocation3], 128, 128, 8
    $region9: #{tpu_custom_call.1} parent=1 // pred_fallthru
      _
    // Predicated region
    $region10: #{tpu_custom_call.1} parent=1 // pred_check
      _
    $region11: #{tpu_custom_call.1} parent=1 // pred_check_branch
      %1449 = sbr.rel (0) target = $region13
    $region12: #{tpu_custom_call.1} parent=1 // pred_region
      %1450 = dma.done [#allocation3], 1024
    $region13: #{tpu_custom_call.1} parent=1 // pred_fallthru
      _
    %1451 = vsyncpa [#allocation3], 1

</llo_original>
